<compile_context>
chip_gen: v7x
topology: tpu7x:2x2x1
jax: 0.10.0
libtpu: 0.0.40
codegen_flags: <defaults>
</compile_context>

<pallas_src>
import jax
import jax.numpy as jnp
from jax.experimental import pallas as pl
from jax.experimental.pallas import tpu as pltpu


def _resblock_kernel(x_ref, w1_ref, s1_ref, b1_ref, w2_ref, s2_ref, b2_ref,
                     o_ref, xpad_ref, ypad_ref, col_ref):
    """One grid step = `nb` images; both conv+BN stages fused, y1 stays in VMEM.

    x_ref   : (NB, H, W, C)        f32 input images (also the residual)
    w*_ref  : (9*C, C)             bf16 3x3 conv weights, rows = k*C + c_in, k = ky*3 + kx
    s*_ref  : (1, C)               folded BN scale = gamma / sqrt(running_var + eps)
    b*_ref  : (1, C)               folded bias     = beta + (conv_bias - running_mean) * scale
    o_ref   : (NB, H, W, C)        f32 output
    xpad_ref, ypad_ref : (NB, H+2, W+2, C) f32 scratch (zero border, interior rewritten per step)
    col_ref : (NB*H*W, 9*C)        f32 im2col scratch (fully rewritten each stage)
    """
    NB, H, W, C = x_ref.shape
    M = NB * H * W

    # Zero the padded scratches only on the first step of the inner ("arbitrary") axis.
    # Interior writes below cover exactly [:, 1:H+1, 1:W+1, :] every step, so the zero
    # border persists across grid steps.  Gating on the arbitrary axis keeps this
    # megacore-safe: each TensorCore starts its own inner loop at 0.
    @pl.when(pl.program_id(1) == 0)
    def _():
        xpad_ref[...] = jnp.zeros_like(xpad_ref)
        ypad_ref[...] = jnp.zeros_like(ypad_ref)

    x = x_ref[...]                                     # (NB, H, W, C) f32, reused as residual
    xpad_ref[:, 1:H + 1, 1:W + 1, :] = x

    def conv3x3_bn(pad_ref, w_ref, s_ref, b_ref):
        # im2col: write each shifted 3x3 tap once into its C-lane column band, then do a
        # single (M, 9C) x (9C, C) matmul (bf16 operands, f32 accumulation on the MXU).
        for k in range(9):                             # static 9-tap unroll
            ky, kx = divmod(k, 3)
            col_ref[:, k * C:(k + 1) * C] = (
                pad_ref[:, ky:ky + H, kx:kx + W, :].reshape(M, C))
        lhs = col_ref[...].astype(jnp.bfloat16)        # one f32->bf16 cast per stage
        y = jnp.dot(lhs, w_ref[...], preferred_element_type=jnp.float32)
        return y * s_ref[...] + b_ref[...]             # folded BN affine (f32)

    # Stage 1: conv3x3 + BN + ReLU.
    y1 = jnp.maximum(conv3x3_bn(xpad_ref, w1_ref, s1_ref, b1_ref), 0.0)   # (M, C) f32

    # Stage-2 input: pad y1 in VMEM — it never goes back to HBM.
    ypad_ref[:, 1:H + 1, 1:W + 1, :] = y1.reshape(NB, H, W, C)

    # Stage 2: conv3x3 + BN, residual add, final ReLU.
    y2 = conv3x3_bn(ypad_ref, w2_ref, s2_ref, b2_ref) + x.reshape(M, C)
    o_ref[...] = jnp.maximum(y2, 0.0).reshape(NB, H, W, C).astype(o_ref.dtype)


def resblock_forward(x, w1, s1, b1, w2, s2, b2, images_per_step=None):
    """x: (N, H, W, C) float32 -> (N, H, W, C) float32 (fused ResBlock forward)."""
    N, H, W, C = x.shape

    # Images per grid step: raises the matmul M dimension (= nb*H*W) toward the MXU height
    # while keeping >= 2 grid steps when the batch allows, so v7x's two TensorCores both get
    # work on the "parallel" outer axis.  On v5e/v6e the extra steps are a cheap serial loop.
    if images_per_step is None:
        nb = N // 2 if N >= 2 else 1
    else:
        nb = min(max(int(images_per_step), 1), N)
    while N % nb:
        nb -= 1
    steps = N // nb
    outer = 2 if (steps % 2 == 0 and steps >= 2) else 1
    inner = steps // outer

    def x_map(o, i):
        return (o * inner + i, 0, 0, 0)

    def const2(o, i):
        return (0, 0)

    return pl.pallas_call(
        _resblock_kernel,
        out_shape=jax.ShapeDtypeStruct((N, H, W, C), jnp.float32),
        grid=(outer, inner),
        in_specs=[
            pl.BlockSpec((nb, H, W, C), x_map),        # x / residual
            pl.BlockSpec((9 * C, C), const2),          # w1 (bf16, im2col row order)
            pl.BlockSpec((1, C), const2),              # s1
            pl.BlockSpec((1, C), const2),              # b1
            pl.BlockSpec((9 * C, C), const2),          # w2
            pl.BlockSpec((1, C), const2),              # s2
            pl.BlockSpec((1, C), const2),              # b2
        ],
        out_specs=pl.BlockSpec((nb, H, W, C), x_map),
        scratch_shapes=[
            pltpu.VMEM((nb, H + 2, W + 2, C), jnp.float32),   # padded x
            pltpu.VMEM((nb, H + 2, W + 2, C), jnp.float32),   # padded y1 (stage-1 output)
            pltpu.VMEM((nb * H * W, 9 * C), jnp.float32),     # im2col buffer (both stages)
        ],
        compiler_params=pltpu.CompilerParams(
            dimension_semantics=("parallel", "arbitrary")),
    )(x, w1, s1, b1, w2, s2, b2)


# ---------------- parameter setup / reference (plain JAX glue) ----------------

def fold_bn(conv_bias, gamma, beta, mean, var, eps=1e-5):
    scale = gamma / jnp.sqrt(var + eps)
    bias = beta + (conv_bias - mean) * scale
    return scale.reshape(1, -1).astype(jnp.float32), bias.reshape(1, -1).astype(jnp.float32)


def make_conv_bn_params(key, C):
    ks = jax.random.split(key, 6)
    fan_in = C * 9
    bound = 1.0 / (fan_in ** 0.5)
    w_oihw = jax.random.uniform(ks[0], (C, C, 3, 3), jnp.float32, -bound, bound)
    conv_b = jax.random.uniform(ks[1], (C,), jnp.float32, -bound, bound)
    gamma = jax.random.uniform(ks[2], (C,), jnp.float32, 0.8, 1.2)
    beta = 0.1 * jax.random.normal(ks[3], (C,), jnp.float32)
    mean = 0.1 * jax.random.normal(ks[4], (C,), jnp.float32)
    var = jax.random.uniform(ks[5], (C,), jnp.float32, 0.5, 1.5)
    w_hwio = jnp.transpose(w_oihw, (2, 3, 1, 0))   # (3, 3, Cin, Cout)
    return w_hwio, conv_b, gamma, beta, mean, var


def _ref_conv_bn(x, w_hwio, conv_b, gamma, beta, mean, var, eps=1e-5):
    # Same numerical contract as the kernel: bf16 conv inputs, f32 accumulation, f32 BN affine.
    y = jax.lax.conv_general_dilated(
        x.astype(jnp.bfloat16), w_hwio.astype(jnp.bfloat16),
        window_strides=(1, 1), padding="SAME",
        dimension_numbers=("NHWC", "HWIO", "NHWC"),
        preferred_element_type=jnp.float32,
    ) + conv_b
    return (y - mean) / jnp.sqrt(var + eps) * gamma + beta


def ref_resblock(x, p1, p2):
    y = jax.nn.relu(_ref_conv_bn(x, *p1))
    y = _ref_conv_bn(y, *p2) + x
    return jax.nn.relu(y)


if __name__ == "__main__":
    N, H, W, C = 2, 8, 8, 32          # batch=2, spatial=8x8, num_hidden=32 (NHWC)

    key = jax.random.PRNGKey(0)
    kxk, k1, k2 = jax.random.split(key, 3)
    x = jax.random.normal(kxk, (N, H, W, C), dtype=jnp.float32)

    p1_raw = make_conv_bn_params(k1, C)
    p2_raw = make_conv_bn_params(k2, C)

    s1, b1 = fold_bn(*p1_raw[1:])
    s2, b2 = fold_bn(*p2_raw[1:])
    # (3,3,Cin,Cout) -> (9*Cin, Cout): row index = (ky*3 + kx)*Cin + cin, im2col band order.
    w1 = p1_raw[0].reshape(9 * C, C).astype(jnp.bfloat16)
    w2 = p2_raw[0].reshape(9 * C, C).astype(jnp.bfloat16)

    out = jax.block_until_ready(resblock_forward(x, w1, s1, b1, w2, s2, b2))
    ref = jax.block_until_ready(ref_resblock(x, p1_raw, p2_raw))

    assert out.shape == (N, H, W, C) and out.dtype == jnp.float32
    max_err = float(jnp.max(jnp.abs(out - ref)))
    # bf16 products are identical in kernel and reference; only the f32 accumulation order
    # (one K=288 dot vs 9 partial sums) differs, so agreement is far tighter than this tolerance.
    assert jnp.allclose(out, ref, rtol=5e-3, atol=5e-3), f"max abs err = {max_err}"
    print("KERNEL_OK")
</pallas_src>

<mosaic_0001>
module attributes {stable_mosaic.version = 11 : i64} {
  func.func @_resblock_kernel(%arg0: i32, %arg1: i32, %arg2: memref<1x8x8x32xf32, #tpu.memory_space<vmem>>, %arg3: memref<288x32xbf16, #tpu.memory_space<vmem>>, %arg4: memref<1x32xf32, #tpu.memory_space<vmem>>, %arg5: memref<1x32xf32, #tpu.memory_space<vmem>>, %arg6: memref<288x32xbf16, #tpu.memory_space<vmem>>, %arg7: memref<1x32xf32, #tpu.memory_space<vmem>>, %arg8: memref<1x32xf32, #tpu.memory_space<vmem>>, %arg9: memref<1x8x8x32xf32, #tpu.memory_space<vmem>>, %arg10: memref<1x10x10x32xf32, #tpu.memory_space<vmem>>, %arg11: memref<1x10x10x32xf32, #tpu.memory_space<vmem>>, %arg12: memref<64x288xf32, #tpu.memory_space<vmem>>) attributes {dimension_semantics = [#tpu.dimension_semantics<parallel>, #tpu.dimension_semantics<arbitrary>], iteration_bounds = array<i64: 2, 1>, scalar_prefetch = 0 : i64, scratch_operands = 3 : i64, tpu.core_type = #tpu.core_type<tc>, window_params = [{transform_indices = @transform_0, window_bounds = array<i64: 1, 8, 8, 32>}, {pipeline_mode = #tpu.pipeline_mode<synchronous>, transform_indices = @transform_1, window_bounds = array<i64: 288, 32>}, {pipeline_mode = #tpu.pipeline_mode<synchronous>, transform_indices = @transform_2, window_bounds = array<i64: 1, 32>}, {pipeline_mode = #tpu.pipeline_mode<synchronous>, transform_indices = @transform_3, window_bounds = array<i64: 1, 32>}, {pipeline_mode = #tpu.pipeline_mode<synchronous>, transform_indices = @transform_4, window_bounds = array<i64: 288, 32>}, {pipeline_mode = #tpu.pipeline_mode<synchronous>, transform_indices = @transform_5, window_bounds = array<i64: 1, 32>}, {pipeline_mode = #tpu.pipeline_mode<synchronous>, transform_indices = @transform_6, window_bounds = array<i64: 1, 32>}, {transform_indices = @transform_7, window_bounds = array<i64: 1, 8, 8, 32>}]} {
    %c0_i32 = arith.constant 0 : i32
    %0 = arith.cmpi eq, %arg1, %c0_i32 : i32
    %1 = arith.extui %0 : i1 to i32
    %c0_i32_0 = arith.constant 0 : i32
    %2 = arith.cmpi ne, %1, %c0_i32_0 : i32
    scf.if %2 {
      %cst_133 = arith.constant 0.000000e+00 : f32
      %89 = vector.broadcast %cst_133 : f32 to vector<1x10x10x32xf32>
      %c0_134 = arith.constant 0 : index
      %c0_135 = arith.constant 0 : index
      %c0_136 = arith.constant 0 : index
      %c0_137 = arith.constant 0 : index
      %90 = vector.load %arg10[%c0_134, %c0_135, %c0_136, %c0_137] : memref<1x10x10x32xf32, #tpu.memory_space<vmem>>, vector<1x10x10x32xf32>
      tpu.vector_store %arg10[%c0_134, %c0_135, %c0_136, %c0_137], %89 {strides = array<i32>} : memref<1x10x10x32xf32, #tpu.memory_space<vmem>>, vector<1x10x10x32xf32>,
      %cst_138 = arith.constant 0.000000e+00 : f32
      %91 = vector.broadcast %cst_138 : f32 to vector<1x10x10x32xf32>
      %c0_139 = arith.constant 0 : index
      %c0_140 = arith.constant 0 : index
      %c0_141 = arith.constant 0 : index
      %c0_142 = arith.constant 0 : index
      %92 = vector.load %arg11[%c0_139, %c0_140, %c0_141, %c0_142] : memref<1x10x10x32xf32, #tpu.memory_space<vmem>>, vector<1x10x10x32xf32>
      tpu.vector_store %arg11[%c0_139, %c0_140, %c0_141, %c0_142], %91 {strides = array<i32>} : memref<1x10x10x32xf32, #tpu.memory_space<vmem>>, vector<1x10x10x32xf32>,
    } else {
    }
    %c0 = arith.constant 0 : index
    %c0_1 = arith.constant 0 : index
    %c0_2 = arith.constant 0 : index
    %c0_3 = arith.constant 0 : index
    %3 = vector.load %arg2[%c0, %c0_1, %c0_2, %c0_3] : memref<1x8x8x32xf32, #tpu.memory_space<vmem>>, vector<1x8x8x32xf32>
    %c0_4 = arith.constant 0 : index
    %c1 = arith.constant 1 : index
    %c1_5 = arith.constant 1 : index
    %c0_6 = arith.constant 0 : index
    %4 = vector.load %arg10[%c0_4, %c1, %c1_5, %c0_6] : memref<1x10x10x32xf32, #tpu.memory_space<vmem>>, vector<1x8x8x32xf32>
    tpu.vector_store %arg10[%c0_4, %c1, %c1_5, %c0_6], %3 {strides = array<i32>} : memref<1x10x10x32xf32, #tpu.memory_space<vmem>>, vector<1x8x8x32xf32>,
    %c0_7 = arith.constant 0 : index
    %c0_8 = arith.constant 0 : index
    %c0_9 = arith.constant 0 : index
    %c0_10 = arith.constant 0 : index
    %5 = vector.load %arg10[%c0_7, %c0_8, %c0_9, %c0_10] : memref<1x10x10x32xf32, #tpu.memory_space<vmem>>, vector<1x8x8x32xf32>
    %6 = vector.shape_cast %5 : vector<1x8x8x32xf32> to vector<64x32xf32>
    %c0_11 = arith.constant 0 : index
    %c0_12 = arith.constant 0 : index
    %7 = vector.load %arg12[%c0_11, %c0_12] : memref<64x288xf32, #tpu.memory_space<vmem>>, vector<64x32xf32>
    tpu.vector_store %arg12[%c0_11, %c0_12], %6 {strides = array<i32>} : memref<64x288xf32, #tpu.memory_space<vmem>>, vector<64x32xf32>,
    %c0_13 = arith.constant 0 : index
    %c0_14 = arith.constant 0 : index
    %c1_15 = arith.constant 1 : index
    %c0_16 = arith.constant 0 : index
    %8 = vector.load %arg10[%c0_13, %c0_14, %c1_15, %c0_16] : memref<1x10x10x32xf32, #tpu.memory_space<vmem>>, vector<1x8x8x32xf32>
    %9 = vector.shape_cast %8 : vector<1x8x8x32xf32> to vector<64x32xf32>
    %c0_17 = arith.constant 0 : index
    %c32 = arith.constant 32 : index
    %10 = vector.load %arg12[%c0_17, %c32] : memref<64x288xf32, #tpu.memory_space<vmem>>, vector<64x32xf32>
    tpu.vector_store %arg12[%c0_17, %c32], %9 {strides = array<i32>} : memref<64x288xf32, #tpu.memory_space<vmem>>, vector<64x32xf32>,
    %c0_18 = arith.constant 0 : index
    %c0_19 = arith.constant 0 : index
    %c2 = arith.constant 2 : index
    %c0_20 = arith.constant 0 : index
    %11 = vector.load %arg10[%c0_18, %c0_19, %c2, %c0_20] : memref<1x10x10x32xf32, #tpu.memory_space<vmem>>, vector<1x8x8x32xf32>
    %12 = vector.shape_cast %11 : vector<1x8x8x32xf32> to vector<64x32xf32>
    %c0_21 = arith.constant 0 : index
    %c64 = arith.constant 64 : index
    %13 = vector.load %arg12[%c0_21, %c64] : memref<64x288xf32, #tpu.memory_space<vmem>>, vector<64x32xf32>
    tpu.vector_store %arg12[%c0_21, %c64], %12 {strides = array<i32>} : memref<64x288xf32, #tpu.memory_space<vmem>>, vector<64x32xf32>,
    %c0_22 = arith.constant 0 : index
    %c1_23 = arith.constant 1 : index
    %c0_24 = arith.constant 0 : index
    %c0_25 = arith.constant 0 : index
    %14 = vector.load %arg10[%c0_22, %c1_23, %c0_24, %c0_25] : memref<1x10x10x32xf32, #tpu.memory_space<vmem>>, vector<1x8x8x32xf32>
    %15 = vector.shape_cast %14 : vector<1x8x8x32xf32> to vector<64x32xf32>
    %c0_26 = arith.constant 0 : index
    %c96 = arith.constant 96 : index
    %16 = vector.load %arg12[%c0_26, %c96] : memref<64x288xf32, #tpu.memory_space<vmem>>, vector<64x32xf32>
    tpu.vector_store %arg12[%c0_26, %c96], %15 {strides = array<i32>} : memref<64x288xf32, #tpu.memory_space<vmem>>, vector<64x32xf32>,
    %c0_27 = arith.constant 0 : index
    %c1_28 = arith.constant 1 : index
    %c1_29 = arith.constant 1 : index
    %c0_30 = arith.constant 0 : index
    %17 = vector.load %arg10[%c0_27, %c1_28, %c1_29, %c0_30] : memref<1x10x10x32xf32, #tpu.memory_space<vmem>>, vector<1x8x8x32xf32>
    %18 = vector.shape_cast %17 : vector<1x8x8x32xf32> to vector<64x32xf32>
    %c0_31 = arith.constant 0 : index
    %c128 = arith.constant 128 : index
    %19 = vector.load %arg12[%c0_31, %c128] : memref<64x288xf32, #tpu.memory_space<vmem>>, vector<64x32xf32>
    tpu.vector_store %arg12[%c0_31, %c128], %18 {strides = array<i32>} : memref<64x288xf32, #tpu.memory_space<vmem>>, vector<64x32xf32>,
    %c0_32 = arith.constant 0 : index
    %c1_33 = arith.constant 1 : index
    %c2_34 = arith.constant 2 : index
    %c0_35 = arith.constant 0 : index
    %20 = vector.load %arg10[%c0_32, %c1_33, %c2_34, %c0_35] : memref<1x10x10x32xf32, #tpu.memory_space<vmem>>, vector<1x8x8x32xf32>
    %21 = vector.shape_cast %20 : vector<1x8x8x32xf32> to vector<64x32xf32>
    %c0_36 = arith.constant 0 : index
    %c160 = arith.constant 160 : index
    %22 = vector.load %arg12[%c0_36, %c160] : memref<64x288xf32, #tpu.memory_space<vmem>>, vector<64x32xf32>
    tpu.vector_store %arg12[%c0_36, %c160], %21 {strides = array<i32>} : memref<64x288xf32, #tpu.memory_space<vmem>>, vector<64x32xf32>,
    %c0_37 = arith.constant 0 : index
    %c2_38 = arith.constant 2 : index
    %c0_39 = arith.constant 0 : index
    %c0_40 = arith.constant 0 : index
    %23 = vector.load %arg10[%c0_37, %c2_38, %c0_39, %c0_40] : memref<1x10x10x32xf32, #tpu.memory_space<vmem>>, vector<1x8x8x32xf32>
    %24 = vector.shape_cast %23 : vector<1x8x8x32xf32> to vector<64x32xf32>
    %c0_41 = arith.constant 0 : index
    %c192 = arith.constant 192 : index
    %25 = vector.load %arg12[%c0_41, %c192] : memref<64x288xf32, #tpu.memory_space<vmem>>, vector<64x32xf32>
    tpu.vector_store %arg12[%c0_41, %c192], %24 {strides = array<i32>} : memref<64x288xf32, #tpu.memory_space<vmem>>, vector<64x32xf32>,
    %c0_42 = arith.constant 0 : index
    %c2_43 = arith.constant 2 : index
    %c1_44 = arith.constant 1 : index
    %c0_45 = arith.constant 0 : index
    %26 = vector.load %arg10[%c0_42, %c2_43, %c1_44, %c0_45] : memref<1x10x10x32xf32, #tpu.memory_space<vmem>>, vector<1x8x8x32xf32>
    %27 = vector.shape_cast %26 : vector<1x8x8x32xf32> to vector<64x32xf32>
    %c0_46 = arith.constant 0 : index
    %c224 = arith.constant 224 : index
    %28 = vector.load %arg12[%c0_46, %c224] : memref<64x288xf32, #tpu.memory_space<vmem>>, vector<64x32xf32>
    tpu.vector_store %arg12[%c0_46, %c224], %27 {strides = array<i32>} : memref<64x288xf32, #tpu.memory_space<vmem>>, vector<64x32xf32>,
    %c0_47 = arith.constant 0 : index
    %c2_48 = arith.constant 2 : index
    %c2_49 = arith.constant 2 : index
    %c0_50 = arith.constant 0 : index
    %29 = vector.load %arg10[%c0_47, %c2_48, %c2_49, %c0_50] : memref<1x10x10x32xf32, #tpu.memory_space<vmem>>, vector<1x8x8x32xf32>
    %30 = vector.shape_cast %29 : vector<1x8x8x32xf32> to vector<64x32xf32>
    %c0_51 = arith.constant 0 : index
    %c256 = arith.constant 256 : index
    %31 = vector.load %arg12[%c0_51, %c256] : memref<64x288xf32, #tpu.memory_space<vmem>>, vector<64x32xf32>
    tpu.vector_store %arg12[%c0_51, %c256], %30 {strides = array<i32>} : memref<64x288xf32, #tpu.memory_space<vmem>>, vector<64x32xf32>,
    %c0_52 = arith.constant 0 : index
    %c0_53 = arith.constant 0 : index
    %32 = vector.load %arg12[%c0_52, %c0_53] : memref<64x288xf32, #tpu.memory_space<vmem>>, vector<64x288xf32>
    %33 = arith.truncf %32 : vector<64x288xf32> to vector<64x288xbf16>
    %c0_54 = arith.constant 0 : index
    %c0_55 = arith.constant 0 : index
    %34 = vector.load %arg3[%c0_54, %c0_55] : memref<288x32xbf16, #tpu.memory_space<vmem>>, vector<288x32xbf16>
    %cst = arith.constant dense<0.000000e+00> : vector<64x32xf32>
    %35 = tpu.matmul %33, %34, %cst {dimension_numbers = #tpu.dot_dimension_numbers<[1], [0], [0], [1], [0, 0, 1, 1], [], []>} : vector<64x288xbf16>, vector<288x32xbf16>, vector<64x32xf32> -> vector<64x32xf32>
    %c0_56 = arith.constant 0 : index
    %c0_57 = arith.constant 0 : index
    %36 = vector.load %arg4[%c0_56, %c0_57] : memref<1x32xf32, #tpu.memory_space<vmem>>, vector<1x32xf32>
    %37 = vector.broadcast %36 : vector<1x32xf32> to vector<64x32xf32>
    %38 = arith.mulf %35, %37 : vector<64x32xf32>
    %c0_58 = arith.constant 0 : index
    %c0_59 = arith.constant 0 : index
    %39 = vector.load %arg5[%c0_58, %c0_59] : memref<1x32xf32, #tpu.memory_space<vmem>>, vector<1x32xf32>
    %40 = vector.broadcast %39 : vector<1x32xf32> to vector<64x32xf32>
    %41 = arith.addf %38, %40 : vector<64x32xf32>
    %cst_60 = arith.constant 0.000000e+00 : f32
    %42 = vector.broadcast %cst_60 : f32 to vector<64x32xf32>
    %43 = arith.maximumf %41, %42 : vector<64x32xf32>
    %44 = vector.shape_cast %43 : vector<64x32xf32> to vector<1x8x8x32xf32>
    %c0_61 = arith.constant 0 : index
    %c1_62 = arith.constant 1 : index
    %c1_63 = arith.constant 1 : index
    %c0_64 = arith.constant 0 : index
    %45 = vector.load %arg11[%c0_61, %c1_62, %c1_63, %c0_64] : memref<1x10x10x32xf32, #tpu.memory_space<vmem>>, vector<1x8x8x32xf32>
    tpu.vector_store %arg11[%c0_61, %c1_62, %c1_63, %c0_64], %44 {strides = array<i32>} : memref<1x10x10x32xf32, #tpu.memory_space<vmem>>, vector<1x8x8x32xf32>,
    %c0_65 = arith.constant 0 : index
    %c0_66 = arith.constant 0 : index
    %c0_67 = arith.constant 0 : index
    %c0_68 = arith.constant 0 : index
    %46 = vector.load %arg11[%c0_65, %c0_66, %c0_67, %c0_68] : memref<1x10x10x32xf32, #tpu.memory_space<vmem>>, vector<1x8x8x32xf32>
    %47 = vector.shape_cast %46 : vector<1x8x8x32xf32> to vector<64x32xf32>
    %c0_69 = arith.constant 0 : index
    %c0_70 = arith.constant 0 : index
    %48 = vector.load %arg12[%c0_69, %c0_70] : memref<64x288xf32, #tpu.memory_space<vmem>>, vector<64x32xf32>
    tpu.vector_store %arg12[%c0_69, %c0_70], %47 {strides = array<i32>} : memref<64x288xf32, #tpu.memory_space<vmem>>, vector<64x32xf32>,
    %c0_71 = arith.constant 0 : index
    %c0_72 = arith.constant 0 : index
    %c1_73 = arith.constant 1 : index
    %c0_74 = arith.constant 0 : index
    %49 = vector.load %arg11[%c0_71, %c0_72, %c1_73, %c0_74] : memref<1x10x10x32xf32, #tpu.memory_space<vmem>>, vector<1x8x8x32xf32>
    %50 = vector.shape_cast %49 : vector<1x8x8x32xf32> to vector<64x32xf32>
    %c0_75 = arith.constant 0 : index
    %c32_76 = arith.constant 32 : index
    %51 = vector.load %arg12[%c0_75, %c32_76] : memref<64x288xf32, #tpu.memory_space<vmem>>, vector<64x32xf32>
    tpu.vector_store %arg12[%c0_75, %c32_76], %50 {strides = array<i32>} : memref<64x288xf32, #tpu.memory_space<vmem>>, vector<64x32xf32>,
    %c0_77 = arith.constant 0 : index
    %c0_78 = arith.constant 0 : index
    %c2_79 = arith.constant 2 : index
    %c0_80 = arith.constant 0 : index
    %52 = vector.load %arg11[%c0_77, %c0_78, %c2_79, %c0_80] : memref<1x10x10x32xf32, #tpu.memory_space<vmem>>, vector<1x8x8x32xf32>
    %53 = vector.shape_cast %52 : vector<1x8x8x32xf32> to vector<64x32xf32>
    %c0_81 = arith.constant 0 : index
    %c64_82 = arith.constant 64 : index
    %54 = vector.load %arg12[%c0_81, %c64_82] : memref<64x288xf32, #tpu.memory_space<vmem>>, vector<64x32xf32>
    tpu.vector_store %arg12[%c0_81, %c64_82], %53 {strides = array<i32>} : memref<64x288xf32, #tpu.memory_space<vmem>>, vector<64x32xf32>,
    %c0_83 = arith.constant 0 : index
    %c1_84 = arith.constant 1 : index
    %c0_85 = arith.constant 0 : index
    %c0_86 = arith.constant 0 : index
    %55 = vector.load %arg11[%c0_83, %c1_84, %c0_85, %c0_86] : memref<1x10x10x32xf32, #tpu.memory_space<vmem>>, vector<1x8x8x32xf32>
    %56 = vector.shape_cast %55 : vector<1x8x8x32xf32> to vector<64x32xf32>
    %c0_87 = arith.constant 0 : index
    %c96_88 = arith.constant 96 : index
    %57 = vector.load %arg12[%c0_87, %c96_88] : memref<64x288xf32, #tpu.memory_space<vmem>>, vector<64x32xf32>
    tpu.vector_store %arg12[%c0_87, %c96_88], %56 {strides = array<i32>} : memref<64x288xf32, #tpu.memory_space<vmem>>, vector<64x32xf32>,
    %c0_89 = arith.constant 0 : index
    %c1_90 = arith.constant 1 : index
    %c1_91 = arith.constant 1 : index
    %c0_92 = arith.constant 0 : index
    %58 = vector.load %arg11[%c0_89, %c1_90, %c1_91, %c0_92] : memref<1x10x10x32xf32, #tpu.memory_space<vmem>>, vector<1x8x8x32xf32>
    %59 = vector.shape_cast %58 : vector<1x8x8x32xf32> to vector<64x32xf32>
    %c0_93 = arith.constant 0 : index
    %c128_94 = arith.constant 128 : index
    %60 = vector.load %arg12[%c0_93, %c128_94] : memref<64x288xf32, #tpu.memory_space<vmem>>, vector<64x32xf32>
    tpu.vector_store %arg12[%c0_93, %c128_94], %59 {strides = array<i32>} : memref<64x288xf32, #tpu.memory_space<vmem>>, vector<64x32xf32>,
    %c0_95 = arith.constant 0 : index
    %c1_96 = arith.constant 1 : index
    %c2_97 = arith.constant 2 : index
    %c0_98 = arith.constant 0 : index
    %61 = vector.load %arg11[%c0_95, %c1_96, %c2_97, %c0_98] : memref<1x10x10x32xf32, #tpu.memory_space<vmem>>, vector<1x8x8x32xf32>
    %62 = vector.shape_cast %61 : vector<1x8x8x32xf32> to vector<64x32xf32>
    %c0_99 = arith.constant 0 : index
    %c160_100 = arith.constant 160 : index
    %63 = vector.load %arg12[%c0_99, %c160_100] : memref<64x288xf32, #tpu.memory_space<vmem>>, vector<64x32xf32>
    tpu.vector_store %arg12[%c0_99, %c160_100], %62 {strides = array<i32>} : memref<64x288xf32, #tpu.memory_space<vmem>>, vector<64x32xf32>,
    %c0_101 = arith.constant 0 : index
    %c2_102 = arith.constant 2 : index
    %c0_103 = arith.constant 0 : index
    %c0_104 = arith.constant 0 : index
    %64 = vector.load %arg11[%c0_101, %c2_102, %c0_103, %c0_104] : memref<1x10x10x32xf32, #tpu.memory_space<vmem>>, vector<1x8x8x32xf32>
    %65 = vector.shape_cast %64 : vector<1x8x8x32xf32> to vector<64x32xf32>
    %c0_105 = arith.constant 0 : index
    %c192_106 = arith.constant 192 : index
    %66 = vector.load %arg12[%c0_105, %c192_106] : memref<64x288xf32, #tpu.memory_space<vmem>>, vector<64x32xf32>
    tpu.vector_store %arg12[%c0_105, %c192_106], %65 {strides = array<i32>} : memref<64x288xf32, #tpu.memory_space<vmem>>, vector<64x32xf32>,
    %c0_107 = arith.constant 0 : index
    %c2_108 = arith.constant 2 : index
    %c1_109 = arith.constant 1 : index
    %c0_110 = arith.constant 0 : index
    %67 = vector.load %arg11[%c0_107, %c2_108, %c1_109, %c0_110] : memref<1x10x10x32xf32, #tpu.memory_space<vmem>>, vector<1x8x8x32xf32>
    %68 = vector.shape_cast %67 : vector<1x8x8x32xf32> to vector<64x32xf32>
    %c0_111 = arith.constant 0 : index
    %c224_112 = arith.constant 224 : index
    %69 = vector.load %arg12[%c0_111, %c224_112] : memref<64x288xf32, #tpu.memory_space<vmem>>, vector<64x32xf32>
    tpu.vector_store %arg12[%c0_111, %c224_112], %68 {strides = array<i32>} : memref<64x288xf32, #tpu.memory_space<vmem>>, vector<64x32xf32>,
    %c0_113 = arith.constant 0 : index
    %c2_114 = arith.constant 2 : index
    %c2_115 = arith.constant 2 : index
    %c0_116 = arith.constant 0 : index
    %70 = vector.load %arg11[%c0_113, %c2_114, %c2_115, %c0_116] : memref<1x10x10x32xf32, #tpu.memory_space<vmem>>, vector<1x8x8x32xf32>
    %71 = vector.shape_cast %70 : vector<1x8x8x32xf32> to vector<64x32xf32>
    %c0_117 = arith.constant 0 : index
    %c256_118 = arith.constant 256 : index
    %72 = vector.load %arg12[%c0_117, %c256_118] : memref<64x288xf32, #tpu.memory_space<vmem>>, vector<64x32xf32>
    tpu.vector_store %arg12[%c0_117, %c256_118], %71 {strides = array<i32>} : memref<64x288xf32, #tpu.memory_space<vmem>>, vector<64x32xf32>,
    %c0_119 = arith.constant 0 : index
    %c0_120 = arith.constant 0 : index
    %73 = vector.load %arg12[%c0_119, %c0_120] : memref<64x288xf32, #tpu.memory_space<vmem>>, vector<64x288xf32>
    %74 = arith.truncf %73 : vector<64x288xf32> to vector<64x288xbf16>
    %c0_121 = arith.constant 0 : index
    %c0_122 = arith.constant 0 : index
    %75 = vector.load %arg6[%c0_121, %c0_122] : memref<288x32xbf16, #tpu.memory_space<vmem>>, vector<288x32xbf16>
    %cst_123 = arith.constant dense<0.000000e+00> : vector<64x32xf32>
    %76 = tpu.matmul %74, %75, %cst_123 {dimension_numbers = #tpu.dot_dimension_numbers<[1], [0], [0], [1], [0, 0, 1, 1], [], []>} : vector<64x288xbf16>, vector<288x32xbf16>, vector<64x32xf32> -> vector<64x32xf32>
    %c0_124 = arith.constant 0 : index
    %c0_125 = arith.constant 0 : index
    %77 = vector.load %arg7[%c0_124, %c0_125] : memref<1x32xf32, #tpu.memory_space<vmem>>, vector<1x32xf32>
    %78 = vector.broadcast %77 : vector<1x32xf32> to vector<64x32xf32>
    %79 = arith.mulf %76, %78 : vector<64x32xf32>
    %c0_126 = arith.constant 0 : index
    %c0_127 = arith.constant 0 : index
    %80 = vector.load %arg8[%c0_126, %c0_127] : memref<1x32xf32, #tpu.memory_space<vmem>>, vector<1x32xf32>
    %81 = vector.broadcast %80 : vector<1x32xf32> to vector<64x32xf32>
    %82 = arith.addf %79, %81 : vector<64x32xf32>
    %83 = vector.shape_cast %3 : vector<1x8x8x32xf32> to vector<64x32xf32>
    %84 = arith.addf %82, %83 : vector<64x32xf32>
    %cst_128 = arith.constant 0.000000e+00 : f32
    %85 = vector.broadcast %cst_128 : f32 to vector<64x32xf32>
    %86 = arith.maximumf %84, %85 : vector<64x32xf32>
    %87 = vector.shape_cast %86 : vector<64x32xf32> to vector<1x8x8x32xf32>
    %c0_129 = arith.constant 0 : index
    %c0_130 = arith.constant 0 : index
    %c0_131 = arith.constant 0 : index
    %c0_132 = arith.constant 0 : index
    %88 = vector.load %arg9[%c0_129, %c0_130, %c0_131, %c0_132] : memref<1x8x8x32xf32, #tpu.memory_space<vmem>>, vector<1x8x8x32xf32>
    tpu.vector_store %arg9[%c0_129, %c0_130, %c0_131, %c0_132], %87 {strides = array<i32>} : memref<1x8x8x32xf32, #tpu.memory_space<vmem>>, vector<1x8x8x32xf32>,
    return
  }
  func.func @transform_0(%arg0: i32, %arg1: i32) -> (i32, i32, i32, i32) {
    %c1_i32 = arith.constant 1 : i32
    %0 = arith.muli %arg0, %c1_i32 : i32
    %1 = arith.addi %0, %arg1 : i32
    %c0_i32 = arith.constant 0 : i32
    %c0_i32_0 = arith.constant 0 : i32
    %c0_i32_1 = arith.constant 0 : i32
    %c0_i32_2 = arith.constant 0 : i32
    return %1, %c0_i32, %c0_i32_0, %c0_i32_1 : i32, i32, i32, i32
  }
  func.func @transform_1(%arg0: i32, %arg1: i32) -> (i32, i32) {
    %c0_i32 = arith.constant 0 : i32
    %c0_i32_0 = arith.constant 0 : i32
    %c0_i32_1 = arith.constant 0 : i32
    return %c0_i32, %c0_i32_0 : i32, i32
  }
  func.func @transform_2(%arg0: i32, %arg1: i32) -> (i32, i32) {
    %c0_i32 = arith.constant 0 : i32
    %c0_i32_0 = arith.constant 0 : i32
    %c0_i32_1 = arith.constant 0 : i32
    return %c0_i32, %c0_i32_0 : i32, i32
  }
  func.func @transform_3(%arg0: i32, %arg1: i32) -> (i32, i32) {
    %c0_i32 = arith.constant 0 : i32
    %c0_i32_0 = arith.constant 0 : i32
    %c0_i32_1 = arith.constant 0 : i32
    return %c0_i32, %c0_i32_0 : i32, i32
  }
  func.func @transform_4(%arg0: i32, %arg1: i32) -> (i32, i32) {
    %c0_i32 = arith.constant 0 : i32
    %c0_i32_0 = arith.constant 0 : i32
    %c0_i32_1 = arith.constant 0 : i32
    return %c0_i32, %c0_i32_0 : i32, i32
  }
  func.func @transform_5(%arg0: i32, %arg1: i32) -> (i32, i32) {
    %c0_i32 = arith.constant 0 : i32
    %c0_i32_0 = arith.constant 0 : i32
    %c0_i32_1 = arith.constant 0 : i32
    return %c0_i32, %c0_i32_0 : i32, i32
  }
  func.func @transform_6(%arg0: i32, %arg1: i32) -> (i32, i32) {
    %c0_i32 = arith.constant 0 : i32
    %c0_i32_0 = arith.constant 0 : i32
    %c0_i32_1 = arith.constant 0 : i32
    return %c0_i32, %c0_i32_0 : i32, i32
  }
  func.func @transform_7(%arg0: i32, %arg1: i32) -> (i32, i32, i32, i32) {
    %c1_i32 = arith.constant 1 : i32
    %0 = arith.muli %arg0, %c1_i32 : i32
    %1 = arith.addi %0, %arg1 : i32
    %c0_i32 = arith.constant 0 : i32
    %c0_i32_0 = arith.constant 0 : i32
    %c0_i32_1 = arith.constant 0 : i32
    %c0_i32_2 = arith.constant 0 : i32
    return %1, %c0_i32, %c0_i32_0, %c0_i32_1 : i32, i32, i32, i32
  }
}

</mosaic_0001>

<llo_original>
// kernel: tpu_custom_call.1
$region0: #{tpu_custom_call.1}
  #allocation0 [shape = 'u32[]', space=smem, size = 0x4, offset = 0x4, fixed_abs, tag = 'smem constant byte address 0x4 - core index']
  #allocation1 [shape = 'u32[144,128]{1,0:T(1,128)}', space=vmem, size = 0x12000, scoped, tag = 'internal scratch']
  #allocation2 [shape = 'f32[1,10,10,32]{3,2,1,0:T(8,128)}', space=vmem, size = 0x14000, scoped, tag = 'scratch operand']
  #allocation3 [shape = 'f32[1,10,10,32]{3,2,1,0:T(8,128)}', space=vmem, size = 0x14000, scoped, tag = 'scratch operand']
  #allocation4 [shape = 'f32[64,288]{1,0:T(8,128)}', space=vmem, size = 0x18000, scoped, tag = 'scratch operand']
  %s0 = inlined_call_operand.vmem [shape: f32[2,8,8,32], index: 0, kind: input, shape index: {}]
  %s1 = inlined_call_operand.vmem [shape: bf16[288,32], index: 1, kind: input, shape index: {}]
  %s2 = inlined_call_operand.vmem [shape: f32[1,32], index: 2, kind: input, shape index: {}]
  %s3 = inlined_call_operand.vmem [shape: f32[1,32], index: 3, kind: input, shape index: {}]
  %s4 = inlined_call_operand.vmem [shape: bf16[288,32], index: 4, kind: input, shape index: {}]
  %s5 = inlined_call_operand.vmem [shape: f32[1,32], index: 5, kind: input, shape index: {}]
  %s6 = inlined_call_operand.vmem [shape: f32[1,32], index: 6, kind: input, shape index: {}]
  %s7 = inlined_call_operand.hbm [shape: f32[2,8,8,32], index: 7, kind: output, shape index: {}]
  %s8 = sld [smem:[#allocation0]]
  $region65: #{tpu_custom_call.1} parent=0
    _
  %s10 = ssub.s32 1, %s8
  %s11 = scalar_select 0, %s10, %s8
  $region1: #{tpu_custom_call.1} parent=0
    #allocation5 [shape = 'u8[65536]{0}', space=vmem, size = 0x10000, scoped, tag = 'output window, operand 0']
    #allocation6 [shape = 's32[2]{0}', space=sflag, size = 0x8, scoped, tag = 'scoped memory for tpu_custom_call.1']
    %12 = vsyncpa [#allocation6], 0
    %s13 = scalar_lea.sflag [#allocation6], 1
    %14 = vsyncpa %s13, 0
    loop: start=0, step=1, limit=4
    $region2: #{tpu_custom_call.1} parent=1 // loop_pre_header
      _
    $region3: #{tpu_custom_call.1} parent=1 // loop_header
      %s16 = sphi 0, %s20
      %p17 = scmp.ge.s32.totalorder %s16, 4
      %s23 = sphi 0, %s35
      %s24 = sphi 0, %s31
      %s25 = sphi 0, %s23
      %s26 = sphi 0, %s24
      %s27 = sphi 0, %s25
      %s28 = sphi 0, %s26
      %s40 = sphi 0, %s42
      %s43 = sphi 0, %s40
      %s44 = sphi 0, %s43
      %s60 = sphi 0, %s44
      %s64 = sphi 0, %s64
      %s66 = sphi 0, %s64
      %s67 = sphi 0, %s66
      %s81 = sphi 0, %s67
      %s85 = sphi 0, %s85
      %s87 = sphi 0, %s85
      %s88 = sphi 0, %s87
      %s102 = sphi 0, %s88
      %s106 = sphi 0, %s106
      %s108 = sphi 0, %s106
      %s109 = sphi 0, %s108
      %s123 = sphi 0, %s109
      %s127 = sphi 0, %s127
      %s129 = sphi 0, %s127
      %s130 = sphi 0, %s129
      %s144 = sphi 0, %s130
      %s148 = sphi 0, %s148
      %s150 = sphi 0, %s148
      %s151 = sphi 0, %s150
      %s165 = sphi 0, %s151
      %s169 = sphi 0, %s169
      %s171 = sphi 0, %s169
      %s172 = sphi 0, %s171
      %s186 = sphi 0, %s172
      %s194 = sphi 0, %s196
      %s197 = sphi 0, %s194
      %s198 = sphi 0, %s197
      %s214 = sphi 0, %s198
    $region4: #{tpu_custom_call.1} parent=1 // loop_header_branch
      %19 = sbr.rel (%p17) target = $region8
    $region5: #{tpu_custom_call.1} parent=1 // loop_body
      %s21 = ssub.s32 %s16, 1
      %s22 = ssub.s32 %s16, 2
      %s29 = sadd.s32 1, %s24
      %p30 = scmp.ge.s32.totalorder %s29, 1
      %s31 = scalar_select %p30, 0, %s29
      %s32 = sadd.s32 1, %s23
      %s33 = scalar_select %p30, %s32, %s23
      %p34 = scmp.ge.s32.totalorder %s33, 2
      %s35 = scalar_select %p34, 0, %s33
      %s36 = sadd.s32 %s23, %s24
      %s37 = sadd.s32 %s35, %s31
      %s38 = ssub.s32 %s36, %s37
      %p39 = scmp.eq.s32.totalorder %s38, 0
      %s41 = sadd.s32 %s40, 1
      %s42 = scalar_select %p39, %s40, %s41
      %p45 = pneg %p39
      %p46 = scmp.eq.s32.totalorder %s16, 1
      %p47 = por %p45, %p46
      %p48 = scmp.ne.s32.totalorder %s40, %s43
      %p49 = scmp.eq.s32.totalorder %s16, 0
      %p50 = por %p48, %p49
      %p51 = scmp.ne.s32.totalorder %s40, %s43
      %p52 = scmp.eq.s32.totalorder %s21, 1
      %p53 = por %p51, %p52
      %p54 = scmp.ne.s32.totalorder %s43, %s44
      %p55 = scmp.eq.s32.totalorder %s21, 0
      %p56 = por %p54, %p55
      %p57 = scmp.ne.s32.totalorder %s43, %s44
      %p58 = scmp.eq.s32.totalorder %s22, 1
      %p59 = por %p57, %p58
      %p61 = scmp.ne.s32.totalorder %s44, %s60
      %p62 = scmp.eq.s32.totalorder %s22, 0
      %p63 = por %p61, %p62
      %s65 = sadd.s32 %s64, 1
      %p68 = scmp.eq.s32.totalorder %s16, 1
      %p69 = scmp.ne.s32.totalorder %s64, %s66
      %p70 = scmp.eq.s32.totalorder %s16, 0
      %p71 = por %p69, %p70
      %p72 = scmp.ne.s32.totalorder %s64, %s66
      %p73 = scmp.eq.s32.totalorder %s21, 1
      %p74 = por %p72, %p73
      %p75 = scmp.ne.s32.totalorder %s66, %s67
      %p76 = scmp.eq.s32.totalorder %s21, 0
      %p77 = por %p75, %p76
      %p78 = scmp.ne.s32.totalorder %s66, %s67
      %p79 = scmp.eq.s32.totalorder %s22, 1
      %p80 = por %p78, %p79
      %p82 = scmp.ne.s32.totalorder %s67, %s81
      %p83 = scmp.eq.s32.totalorder %s22, 0
      %p84 = por %p82, %p83
      %s86 = sadd.s32 %s85, 1
      %p89 = scmp.eq.s32.totalorder %s16, 1
      %p90 = scmp.ne.s32.totalorder %s85, %s87
      %p91 = scmp.eq.s32.totalorder %s16, 0
      %p92 = por %p90, %p91
      %p93 = scmp.ne.s32.totalorder %s85, %s87
      %p94 = scmp.eq.s32.totalorder %s21, 1
      %p95 = por %p93, %p94
      %p96 = scmp.ne.s32.totalorder %s87, %s88
      %p97 = scmp.eq.s32.totalorder %s21, 0
      %p98 = por %p96, %p97
      %p99 = scmp.ne.s32.totalorder %s87, %s88
      %p100 = scmp.eq.s32.totalorder %s22, 1
      %p101 = por %p99, %p100
      %p103 = scmp.ne.s32.totalorder %s88, %s102
      %p104 = scmp.eq.s32.totalorder %s22, 0
      %p105 = por %p103, %p104
      %s107 = sadd.s32 %s106, 1
      %p110 = scmp.eq.s32.totalorder %s16, 1
      %p111 = scmp.ne.s32.totalorder %s106, %s108
      %p112 = scmp.eq.s32.totalorder %s16, 0
      %p113 = por %p111, %p112
      %p114 = scmp.ne.s32.totalorder %s106, %s108
      %p115 = scmp.eq.s32.totalorder %s21, 1
      %p116 = por %p114, %p115
      %p117 = scmp.ne.s32.totalorder %s108, %s109
      %p118 = scmp.eq.s32.totalorder %s21, 0
      %p119 = por %p117, %p118
      %p120 = scmp.ne.s32.totalorder %s108, %s109
      %p121 = scmp.eq.s32.totalorder %s22, 1
      %p122 = por %p120, %p121
      %p124 = scmp.ne.s32.totalorder %s109, %s123
      %p125 = scmp.eq.s32.totalorder %s22, 0
      %p126 = por %p124, %p125
      %s128 = sadd.s32 %s127, 1
      %p131 = scmp.eq.s32.totalorder %s16, 1
      %p132 = scmp.ne.s32.totalorder %s127, %s129
      %p133 = scmp.eq.s32.totalorder %s16, 0
      %p134 = por %p132, %p133
      %p135 = scmp.ne.s32.totalorder %s127, %s129
      %p136 = scmp.eq.s32.totalorder %s21, 1
      %p137 = por %p135, %p136
      %p138 = scmp.ne.s32.totalorder %s129, %s130
      %p139 = scmp.eq.s32.totalorder %s21, 0
      %p140 = por %p138, %p139
      %p141 = scmp.ne.s32.totalorder %s129, %s130
      %p142 = scmp.eq.s32.totalorder %s22, 1
      %p143 = por %p141, %p142
      %p145 = scmp.ne.s32.totalorder %s130, %s144
      %p146 = scmp.eq.s32.totalorder %s22, 0
      %p147 = por %p145, %p146
      %s149 = sadd.s32 %s148, 1
      %p152 = scmp.eq.s32.totalorder %s16, 1
      %p153 = scmp.ne.s32.totalorder %s148, %s150
      %p154 = scmp.eq.s32.totalorder %s16, 0
      %p155 = por %p153, %p154
      %p156 = scmp.ne.s32.totalorder %s148, %s150
      %p157 = scmp.eq.s32.totalorder %s21, 1
      %p158 = por %p156, %p157
      %p159 = scmp.ne.s32.totalorder %s150, %s151
      %p160 = scmp.eq.s32.totalorder %s21, 0
      %p161 = por %p159, %p160
      %p162 = scmp.ne.s32.totalorder %s150, %s151
      %p163 = scmp.eq.s32.totalorder %s22, 1
      %p164 = por %p162, %p163
      %p166 = scmp.ne.s32.totalorder %s151, %s165
      %p167 = scmp.eq.s32.totalorder %s22, 0
      %p168 = por %p166, %p167
      %s170 = sadd.s32 %s169, 1
      %p173 = scmp.eq.s32.totalorder %s16, 1
      %p174 = scmp.ne.s32.totalorder %s169, %s171
      %p175 = scmp.eq.s32.totalorder %s16, 0
      %p176 = por %p174, %p175
      %p177 = scmp.ne.s32.totalorder %s169, %s171
      %p178 = scmp.eq.s32.totalorder %s21, 1
      %p179 = por %p177, %p178
      %p180 = scmp.ne.s32.totalorder %s171, %s172
      %p181 = scmp.eq.s32.totalorder %s21, 0
      %p182 = por %p180, %p181
      %p183 = scmp.ne.s32.totalorder %s171, %s172
      %p184 = scmp.eq.s32.totalorder %s22, 1
      %p185 = por %p183, %p184
      %p187 = scmp.ne.s32.totalorder %s172, %s186
      %p188 = scmp.eq.s32.totalorder %s22, 0
      %p189 = por %p187, %p188
      %s190 = sadd.s32 %s23, %s24
      %s191 = sadd.s32 %s35, %s31
      %s192 = ssub.s32 %s190, %s191
      %p193 = scmp.eq.s32.totalorder %s192, 0
      %s195 = sadd.s32 %s194, 1
      %s196 = scalar_select %p193, %s194, %s195
      %p199 = pneg %p193
      %p200 = scmp.eq.s32.totalorder %s16, 1
      %p201 = por %p199, %p200
      %p202 = scmp.ne.s32.totalorder %s194, %s197
      %p203 = scmp.eq.s32.totalorder %s16, 0
      %p204 = por %p202, %p203
      %p205 = scmp.ne.s32.totalorder %s194, %s197
      %p206 = scmp.eq.s32.totalorder %s21, 1
      %p207 = por %p205, %p206
      %p208 = scmp.ne.s32.totalorder %s197, %s198
      %p209 = scmp.eq.s32.totalorder %s21, 0
      %p210 = por %p208, %p209
      %p211 = scmp.ne.s32.totalorder %s197, %s198
      %p212 = scmp.eq.s32.totalorder %s22, 1
      %p213 = por %p211, %p212
      %p215 = scmp.ne.s32.totalorder %s198, %s214
      %p216 = scmp.eq.s32.totalorder %s22, 0
      %p217 = por %p215, %p216
      %p218 = scmp.le.s32.totalorder 1, %s16
      %p219 = scmp.lt.s32.totalorder %s16, 3
      %p220 = pnand %p218, %p219
      %p221 = pneg %p220
      // Predicated region
      $region9: #{tpu_custom_call.1} parent=5 // pred_check
        _
      $region10: #{tpu_custom_call.1} parent=5 // pred_check_branch
        %223 = sbr.rel (%p220) target = $region12
      $region11: #{tpu_custom_call.1} parent=5 // pred_region
        %s224 = ssub.s32 %s16, 1
        // Predicated region
        $region13: #{tpu_custom_call.1} parent=11 // pred_check
          %p225 = pneg %p77
        $region14: #{tpu_custom_call.1} parent=11 // pred_check_branch
          %227 = sbr.rel (%p225) target = $region16
        $region15: #{tpu_custom_call.1} parent=11 // pred_region
          _
        $region16: #{tpu_custom_call.1} parent=11 // pred_fallthru
          _
        // Predicated region
        $region17: #{tpu_custom_call.1} parent=11 // pred_check
          %p228 = pneg %p98
        $region18: #{tpu_custom_call.1} parent=11 // pred_check_branch
          %230 = sbr.rel (%p228) target = $region20
        $region19: #{tpu_custom_call.1} parent=11 // pred_region
          _
        $region20: #{tpu_custom_call.1} parent=11 // pred_fallthru
          _
        // Predicated region
        $region21: #{tpu_custom_call.1} parent=11 // pred_check
          %p231 = pneg %p119
        $region22: #{tpu_custom_call.1} parent=11 // pred_check_branch
          %233 = sbr.rel (%p231) target = $region24
        $region23: #{tpu_custom_call.1} parent=11 // pred_region
          _
        $region24: #{tpu_custom_call.1} parent=11 // pred_fallthru
          _
        // Predicated region
        $region25: #{tpu_custom_call.1} parent=11 // pred_check
          %p234 = pneg %p140
        $region26: #{tpu_custom_call.1} parent=11 // pred_check_branch
          %236 = sbr.rel (%p234) target = $region28
        $region27: #{tpu_custom_call.1} parent=11 // pred_region
          _
        $region28: #{tpu_custom_call.1} parent=11 // pred_fallthru
          _
        // Predicated region
        $region29: #{tpu_custom_call.1} parent=11 // pred_check
          %p237 = pneg %p161
        $region30: #{tpu_custom_call.1} parent=11 // pred_check_branch
          %239 = sbr.rel (%p237) target = $region32
        $region31: #{tpu_custom_call.1} parent=11 // pred_region
          _
        $region32: #{tpu_custom_call.1} parent=11 // pred_fallthru
          _
        // Predicated region
        $region33: #{tpu_custom_call.1} parent=11 // pred_check
          %p240 = pneg %p182
        $region34: #{tpu_custom_call.1} parent=11 // pred_check_branch
          %242 = sbr.rel (%p240) target = $region36
        $region35: #{tpu_custom_call.1} parent=11 // pred_region
          _
        $region36: #{tpu_custom_call.1} parent=11 // pred_fallthru
          _
      $region12: #{tpu_custom_call.1} parent=5 // pred_fallthru
        _
      %p243 = scmp.lt.s32.totalorder %s16, 2
      // Predicated region
      $region37: #{tpu_custom_call.1} parent=5 // pred_check
        %p244 = pneg %p243
      $region38: #{tpu_custom_call.1} parent=5 // pred_check_branch
        %246 = sbr.rel (%p244) target = $region40
      $region39: #{tpu_custom_call.1} parent=5 // pred_region
        // Predicated region
        $region41: #{tpu_custom_call.1} parent=39 // pred_check
          %p247 = pneg %p50
        $region42: #{tpu_custom_call.1} parent=39 // pred_check_branch
          %249 = sbr.rel (%p247) target = $region44
        $region43: #{tpu_custom_call.1} parent=39 // pred_region
          %s250 = sadd.s32 %s23, %s24
          %p251 = scmp.lt.s32.totalorder %s250, 1
          %s252 = scalar_select %p251, %s250, 1
          %s253 = smul.addr %s252, 8
          %s254 = smul.addr %s253, 8
          %s255 = scalar_lea.vmem %s0, %s254
          %s256 = sadd.s32 %s23, %s24
        $region44: #{tpu_custom_call.1} parent=39 // pred_fallthru
          _
      $region40: #{tpu_custom_call.1} parent=5 // pred_fallthru
        _
      %p257 = scmp.le.s32.totalorder 1, %s16
      %p258 = scmp.lt.s32.totalorder %s16, 3
      %p259 = pnand %p257, %p258
      %p260 = pneg %p259
      // Predicated region
      $region45: #{tpu_custom_call.1} parent=5 // pred_check
        _
      $region46: #{tpu_custom_call.1} parent=5 // pred_check_branch
        %262 = sbr.rel (%p259) target = $region48
      $region47: #{tpu_custom_call.1} parent=5 // pred_region
        %s263 = ssub.s32 %s16, 1
        %s264 = sadd.s32 %s25, %s26
        %p265 = scmp.lt.s32.totalorder %s264, 1
        %s266 = scalar_select %p265, %s264, 1
        %s267 = smul.addr %s266, 8
        %s268 = smul.addr %s267, 8
        %s269 = scalar_lea.vmem %s0, %s268
        %p270 = pneg %p56
        %p271 = pneg %p53
        %p272 = pneg %p77
        %p273 = pneg %p74
        %p274 = pneg %p98
        %p275 = pneg %p95
        %p276 = pneg %p119
        %p277 = pneg %p116
        %p278 = pneg %p140
        %p279 = pneg %p137
        %p280 = pneg %p161
        %p281 = pneg %p158
        %p282 = pneg %p182
        %p283 = pneg %p179
        %p284 = pneg %p210
        %p285 = pneg %p207
        %s286 = sand.u32 %s197, 1
        %s287 = scalar_lea.sflag [#allocation6], %s286
        %s288 = sand.u32 %s197, 1
        %s289 = smul.addr %s288, 64
        %s290 = scalar_lea.vmem [#allocation5], %s289
        %s291 = sadd.s32 %s25, %s26
        %p292 = scmp.lt.s32.totalorder %s291, 1
        %s293 = scalar_select %p292, %s291, 1
        %s294 = smul.addr %s293, 8
        %s295 = smul.addr %s294, 8
        %s296 = scalar_lea.vmem %s0, %s295
        %s297 = sadd.s32 %s25, %s26
        %s298 = sadd.s32 %s25, %s26
        %p300 = scmp.eq.s32.totalorder %s26, 0
        // Predicated region
        $region49: #{tpu_custom_call.1} parent=47 // pred_check
          %p301 = pneg %p300
        $region50: #{tpu_custom_call.1} parent=47 // pred_check_branch
          %303 = sbr.rel (%p301) target = $region52
        $region51: #{tpu_custom_call.1} parent=47 // pred_region
          %vm304 = vcmask 261120
          %305 = vst.msk [vmem:[#allocation2] sm:$0xff] %vm304, 0.0
          %vm306 = vcmask 254976
          %307 = vst.msk [vmem:[#allocation2 + $0x8] sm:$0x3] %vm306, 0.0
          %308 = vst.msk [vmem:[#allocation2 + $0x10] sm:$0xff] %vm304, 0.0
          %309 = vst.msk [vmem:[#allocation2 + $0x18] sm:$0x3] %vm306, 0.0
          %310 = vst.msk [vmem:[#allocation2 + $0x20] sm:$0xff] %vm304, 0.0
          %311 = vst.msk [vmem:[#allocation2 + $0x28] sm:$0x3] %vm306, 0.0
          %312 = vst.msk [vmem:[#allocation2 + $0x30] sm:$0xff] %vm304, 0.0
          %313 = vst.msk [vmem:[#allocation2 + $0x38] sm:$0x3] %vm306, 0.0
          %314 = vst.msk [vmem:[#allocation2 + $0x40] sm:$0xff] %vm304, 0.0
          %315 = vst.msk [vmem:[#allocation2 + $0x48] sm:$0x3] %vm306, 0.0
          %316 = vst.msk [vmem:[#allocation2 + $0x50] sm:$0xff] %vm304, 0.0
          %317 = vst.msk [vmem:[#allocation2 + $0x58] sm:$0x3] %vm306, 0.0
          %318 = vst.msk [vmem:[#allocation2 + $0x60] sm:$0xff] %vm304, 0.0
          %319 = vst.msk [vmem:[#allocation2 + $0x68] sm:$0x3] %vm306, 0.0
          %320 = vst.msk [vmem:[#allocation2 + $0x70] sm:$0xff] %vm304, 0.0
          %321 = vst.msk [vmem:[#allocation2 + $0x78] sm:$0x3] %vm306, 0.0
          %322 = vst.msk [vmem:[#allocation2 + $0x80] sm:$0xff] %vm304, 0.0
          %323 = vst.msk [vmem:[#allocation2 + $0x88] sm:$0x3] %vm306, 0.0
          %324 = vst.msk [vmem:[#allocation2 + $0x90] sm:$0xff] %vm304, 0.0
          %325 = vst.msk [vmem:[#allocation2 + $0x98] sm:$0x3] %vm306, 0.0
          %326 = vst.msk [vmem:[#allocation3] sm:$0xff] %vm304, 0.0
          %327 = vst.msk [vmem:[#allocation3 + $0x8] sm:$0x3] %vm306, 0.0
          %328 = vst.msk [vmem:[#allocation3 + $0x10] sm:$0xff] %vm304, 0.0
          %329 = vst.msk [vmem:[#allocation3 + $0x18] sm:$0x3] %vm306, 0.0
          %330 = vst.msk [vmem:[#allocation3 + $0x20] sm:$0xff] %vm304, 0.0
          %331 = vst.msk [vmem:[#allocation3 + $0x28] sm:$0x3] %vm306, 0.0
          %332 = vst.msk [vmem:[#allocation3 + $0x30] sm:$0xff] %vm304, 0.0
          %333 = vst.msk [vmem:[#allocation3 + $0x38] sm:$0x3] %vm306, 0.0
          %334 = vst.msk [vmem:[#allocation3 + $0x40] sm:$0xff] %vm304, 0.0
          %335 = vst.msk [vmem:[#allocation3 + $0x48] sm:$0x3] %vm306, 0.0
          %336 = vst.msk [vmem:[#allocation3 + $0x50] sm:$0xff] %vm304, 0.0
          %337 = vst.msk [vmem:[#allocation3 + $0x58] sm:$0x3] %vm306, 0.0
          %338 = vst.msk [vmem:[#allocation3 + $0x60] sm:$0xff] %vm304, 0.0
          %339 = vst.msk [vmem:[#allocation3 + $0x68] sm:$0x3] %vm306, 0.0
          %340 = vst.msk [vmem:[#allocation3 + $0x70] sm:$0xff] %vm304, 0.0
          %341 = vst.msk [vmem:[#allocation3 + $0x78] sm:$0x3] %vm306, 0.0
          %342 = vst.msk [vmem:[#allocation3 + $0x80] sm:$0xff] %vm304, 0.0
          %343 = vst.msk [vmem:[#allocation3 + $0x88] sm:$0x3] %vm306, 0.0
          %344 = vst.msk [vmem:[#allocation3 + $0x90] sm:$0xff] %vm304, 0.0
          %345 = vst.msk [vmem:[#allocation3 + $0x98] sm:$0x3] %vm306, 0.0
        $region52: #{tpu_custom_call.1} parent=47 // pred_fallthru
          _
        %v346 = vld [vmem:[%s296] sm:$0xff]
        %v347 = vld [vmem:[%s296 + $0x8] sm:$0xff]
        %v348 = vld [vmem:[%s296 + $0x10] sm:$0xff]
        %v349 = vld [vmem:[%s296 + $0x18] sm:$0xff]
        %v350 = vld [vmem:[%s296 + $0x20] sm:$0xff]
        %v351 = vld [vmem:[%s296 + $0x28] sm:$0xff]
        %v352 = vld [vmem:[%s296 + $0x30] sm:$0xff]
        %v353 = vld [vmem:[%s296 + $0x38] sm:$0xff]
        %s354 = scalar_lea.vmem [#allocation2], 16
        %vm355 = vcmask 261120
        %356 = vst.msk [vmem:[%s354 + $0x1] sm:$0xff] %vm355, %v346
        %357 = vst.msk [vmem:[%s354 + $0x11] sm:$0xff] %vm355, %v347
        %358 = vst.msk [vmem:[%s354 + $0x21] sm:$0xff] %vm355, %v348
        %359 = vst.msk [vmem:[%s354 + $0x31] sm:$0xff] %vm355, %v349
        %360 = vst.msk [vmem:[%s354 + $0x41] sm:$0xff] %vm355, %v350
        %361 = vst.msk [vmem:[%s354 + $0x51] sm:$0xff] %vm355, %v351
        %362 = vst.msk [vmem:[%s354 + $0x61] sm:$0xff] %vm355, %v352
        %363 = vst.msk [vmem:[%s354 + $0x71] sm:$0xff] %vm355, %v353
        %v364 = vld [vmem:[#allocation2] sm:$0xff]
        %v365 = vld [vmem:[#allocation2 + $0x10] sm:$0xff]
        %v366 = vld [vmem:[#allocation2 + $0x20] sm:$0xff]
        %v367 = vld [vmem:[#allocation2 + $0x30] sm:$0xff]
        %v368 = vld [vmem:[#allocation2 + $0x40] sm:$0xff]
        %v369 = vld [vmem:[#allocation2 + $0x50] sm:$0xff]
        %v370 = vld [vmem:[#allocation2 + $0x60] sm:$0xff]
        %v371 = vld [vmem:[#allocation2 + $0x70] sm:$0xff]
        %372 = vst.msk [vmem:[#allocation4] sm:$0xff] %vm355, %v364
        %373 = vst.msk [vmem:[#allocation4 + $0x18] sm:$0xff] %vm355, %v365
        %374 = vst.msk [vmem:[#allocation4 + $0x30] sm:$0xff] %vm355, %v366
        %375 = vst.msk [vmem:[#allocation4 + $0x48] sm:$0xff] %vm355, %v367
        %376 = vst.msk [vmem:[#allocation4 + $0x60] sm:$0xff] %vm355, %v368
        %377 = vst.msk [vmem:[#allocation4 + $0x78] sm:$0xff] %vm355, %v369
        %378 = vst.msk [vmem:[#allocation4 + $0x90] sm:$0xff] %vm355, %v370
        %379 = vst.msk [vmem:[#allocation4 + $0xa8] sm:$0xff] %vm355, %v371
        %v380 = vld [vmem:[#allocation2 + $0x1] sm:$0xff]
        %v381 = vld [vmem:[#allocation2 + $0x11] sm:$0xff]
        %v382 = vld [vmem:[#allocation2 + $0x21] sm:$0xff]
        %v383 = vld [vmem:[#allocation2 + $0x31] sm:$0xff]
        %v384 = vld [vmem:[#allocation2 + $0x41] sm:$0xff]
        %v385 = vld [vmem:[#allocation2 + $0x51] sm:$0xff]
        %v386 = vld [vmem:[#allocation2 + $0x61] sm:$0xff]
        %v387 = vld [vmem:[#allocation2 + $0x71] sm:$0xff]
        %396 = vrot.lane.b32.xlu0 %v380, 32
        %v397 = vpop.permute.xlu0 %396
        %398 = vrot.lane.b32.xlu0 %v381, 32
        %v399 = vpop.permute.xlu0 %398
        %400 = vrot.lane.b32.xlu0 %v382, 32
        %v401 = vpop.permute.xlu0 %400
        %402 = vrot.lane.b32.xlu0 %v383, 32
        %v403 = vpop.permute.xlu0 %402
        %404 = vrot.lane.b32.xlu0 %v384, 32
        %v405 = vpop.permute.xlu0 %404
        %406 = vrot.lane.b32.xlu0 %v385, 32
        %v407 = vpop.permute.xlu0 %406
        %408 = vrot.lane.b32.xlu0 %v386, 32
        %v409 = vpop.permute.xlu0 %408
        %410 = vrot.lane.b32.xlu0 %v387, 32
        %v411 = vpop.permute.xlu0 %410
        %vm420 = vcmask 523520
        %421 = vst.msk [vmem:[#allocation4] sm:$0xff] %vm420, %v397
        %422 = vst.msk [vmem:[#allocation4 + $0x18] sm:$0xff] %vm420, %v399
        %423 = vst.msk [vmem:[#allocation4 + $0x30] sm:$0xff] %vm420, %v401
        %424 = vst.msk [vmem:[#allocation4 + $0x48] sm:$0xff] %vm420, %v403
        %425 = vst.msk [vmem:[#allocation4 + $0x60] sm:$0xff] %vm420, %v405
        %426 = vst.msk [vmem:[#allocation4 + $0x78] sm:$0xff] %vm420, %v407
        %427 = vst.msk [vmem:[#allocation4 + $0x90] sm:$0xff] %vm420, %v409
        %428 = vst.msk [vmem:[#allocation4 + $0xa8] sm:$0xff] %vm420, %v411
        %v429 = vld [vmem:[#allocation2 + $0x2] sm:$0xff]
        %v430 = vld [vmem:[#allocation2 + $0x12] sm:$0xff]
        %v431 = vld [vmem:[#allocation2 + $0x22] sm:$0xff]
        %v432 = vld [vmem:[#allocation2 + $0x32] sm:$0xff]
        %v433 = vld [vmem:[#allocation2 + $0x42] sm:$0xff]
        %v434 = vld [vmem:[#allocation2 + $0x52] sm:$0xff]
        %v435 = vld [vmem:[#allocation2 + $0x62] sm:$0xff]
        %v436 = vld [vmem:[#allocation2 + $0x72] sm:$0xff]
        %445 = vrot.lane.b32.xlu0 %v429, 64
        %v446 = vpop.permute.xlu0 %445
        %447 = vrot.lane.b32.xlu0 %v430, 64
        %v448 = vpop.permute.xlu0 %447
        %449 = vrot.lane.b32.xlu0 %v431, 64
        %v450 = vpop.permute.xlu0 %449
        %451 = vrot.lane.b32.xlu0 %v432, 64
        %v452 = vpop.permute.xlu0 %451
        %453 = vrot.lane.b32.xlu0 %v433, 64
        %v454 = vpop.permute.xlu0 %453
        %455 = vrot.lane.b32.xlu0 %v434, 64
        %v456 = vpop.permute.xlu0 %455
        %457 = vrot.lane.b32.xlu0 %v435, 64
        %v458 = vpop.permute.xlu0 %457
        %459 = vrot.lane.b32.xlu0 %v436, 64
        %v460 = vpop.permute.xlu0 %459
        %vm469 = vcmask 785920
        %470 = vst.msk [vmem:[#allocation4] sm:$0xff] %vm469, %v446
        %471 = vst.msk [vmem:[#allocation4 + $0x18] sm:$0xff] %vm469, %v448
        %472 = vst.msk [vmem:[#allocation4 + $0x30] sm:$0xff] %vm469, %v450
        %473 = vst.msk [vmem:[#allocation4 + $0x48] sm:$0xff] %vm469, %v452
        %474 = vst.msk [vmem:[#allocation4 + $0x60] sm:$0xff] %vm469, %v454
        %475 = vst.msk [vmem:[#allocation4 + $0x78] sm:$0xff] %vm469, %v456
        %476 = vst.msk [vmem:[#allocation4 + $0x90] sm:$0xff] %vm469, %v458
        %477 = vst.msk [vmem:[#allocation4 + $0xa8] sm:$0xff] %vm469, %v460
        %v478 = vld [vmem:[%s354] sm:$0xff]
        %v479 = vld [vmem:[%s354 + $0x10] sm:$0xff]
        %v480 = vld [vmem:[%s354 + $0x20] sm:$0xff]
        %v481 = vld [vmem:[%s354 + $0x30] sm:$0xff]
        %v482 = vld [vmem:[%s354 + $0x40] sm:$0xff]
        %v483 = vld [vmem:[%s354 + $0x50] sm:$0xff]
        %v484 = vld [vmem:[%s354 + $0x60] sm:$0xff]
        %v485 = vld [vmem:[%s354 + $0x70] sm:$0xff]
        %494 = vrot.lane.b32.xlu0 %v478, 96
        %v495 = vpop.permute.xlu0 %494
        %496 = vrot.lane.b32.xlu0 %v479, 96
        %v497 = vpop.permute.xlu0 %496
        %498 = vrot.lane.b32.xlu0 %v480, 96
        %v499 = vpop.permute.xlu0 %498
        %500 = vrot.lane.b32.xlu0 %v481, 96
        %v501 = vpop.permute.xlu0 %500
        %502 = vrot.lane.b32.xlu0 %v482, 96
        %v503 = vpop.permute.xlu0 %502
        %504 = vrot.lane.b32.xlu0 %v483, 96
        %v505 = vpop.permute.xlu0 %504
        %506 = vrot.lane.b32.xlu0 %v484, 96
        %v507 = vpop.permute.xlu0 %506
        %508 = vrot.lane.b32.xlu0 %v485, 96
        %v509 = vpop.permute.xlu0 %508
        %vm518 = vcmask 1048320
        %519 = vst.msk [vmem:[#allocation4] sm:$0xff] %vm518, %v495
        %520 = vst.msk [vmem:[#allocation4 + $0x18] sm:$0xff] %vm518, %v497
        %521 = vst.msk [vmem:[#allocation4 + $0x30] sm:$0xff] %vm518, %v499
        %522 = vst.msk [vmem:[#allocation4 + $0x48] sm:$0xff] %vm518, %v501
        %523 = vst.msk [vmem:[#allocation4 + $0x60] sm:$0xff] %vm518, %v503
        %524 = vst.msk [vmem:[#allocation4 + $0x78] sm:$0xff] %vm518, %v505
        %525 = vst.msk [vmem:[#allocation4 + $0x90] sm:$0xff] %vm518, %v507
        %526 = vst.msk [vmem:[#allocation4 + $0xa8] sm:$0xff] %vm518, %v509
        %v527 = vld [vmem:[%s354 + $0x1] sm:$0xff]
        %v528 = vld [vmem:[%s354 + $0x11] sm:$0xff]
        %v529 = vld [vmem:[%s354 + $0x21] sm:$0xff]
        %v530 = vld [vmem:[%s354 + $0x31] sm:$0xff]
        %v531 = vld [vmem:[%s354 + $0x41] sm:$0xff]
        %v532 = vld [vmem:[%s354 + $0x51] sm:$0xff]
        %v533 = vld [vmem:[%s354 + $0x61] sm:$0xff]
        %v534 = vld [vmem:[%s354 + $0x71] sm:$0xff]
        %535 = vst.msk [vmem:[#allocation4 + $0x8] sm:$0xff] %vm355, %v527
        %536 = vst.msk [vmem:[#allocation4 + $0x20] sm:$0xff] %vm355, %v528
        %537 = vst.msk [vmem:[#allocation4 + $0x38] sm:$0xff] %vm355, %v529
        %538 = vst.msk [vmem:[#allocation4 + $0x50] sm:$0xff] %vm355, %v530
        %539 = vst.msk [vmem:[#allocation4 + $0x68] sm:$0xff] %vm355, %v531
        %540 = vst.msk [vmem:[#allocation4 + $0x80] sm:$0xff] %vm355, %v532
        %541 = vst.msk [vmem:[#allocation4 + $0x98] sm:$0xff] %vm355, %v533
        %542 = vst.msk [vmem:[#allocation4 + $0xb0] sm:$0xff] %vm355, %v534
        %v543 = vld [vmem:[%s354 + $0x2] sm:$0xff]
        %v544 = vld [vmem:[%s354 + $0x12] sm:$0xff]
        %v545 = vld [vmem:[%s354 + $0x22] sm:$0xff]
        %v546 = vld [vmem:[%s354 + $0x32] sm:$0xff]
        %v547 = vld [vmem:[%s354 + $0x42] sm:$0xff]
        %v548 = vld [vmem:[%s354 + $0x52] sm:$0xff]
        %v549 = vld [vmem:[%s354 + $0x62] sm:$0xff]
        %v550 = vld [vmem:[%s354 + $0x72] sm:$0xff]
        %559 = vrot.lane.b32.xlu0 %v543, 32
        %v560 = vpop.permute.xlu0 %559
        %561 = vrot.lane.b32.xlu0 %v544, 32
        %v562 = vpop.permute.xlu0 %561
        %563 = vrot.lane.b32.xlu0 %v545, 32
        %v564 = vpop.permute.xlu0 %563
        %565 = vrot.lane.b32.xlu0 %v546, 32
        %v566 = vpop.permute.xlu0 %565
        %567 = vrot.lane.b32.xlu0 %v547, 32
        %v568 = vpop.permute.xlu0 %567
        %569 = vrot.lane.b32.xlu0 %v548, 32
        %v570 = vpop.permute.xlu0 %569
        %571 = vrot.lane.b32.xlu0 %v549, 32
        %v572 = vpop.permute.xlu0 %571
        %573 = vrot.lane.b32.xlu0 %v550, 32
        %v574 = vpop.permute.xlu0 %573
        %583 = vst.msk [vmem:[#allocation4 + $0x8] sm:$0xff] %vm420, %v560
        %584 = vst.msk [vmem:[#allocation4 + $0x20] sm:$0xff] %vm420, %v562
        %585 = vst.msk [vmem:[#allocation4 + $0x38] sm:$0xff] %vm420, %v564
        %586 = vst.msk [vmem:[#allocation4 + $0x50] sm:$0xff] %vm420, %v566
        %587 = vst.msk [vmem:[#allocation4 + $0x68] sm:$0xff] %vm420, %v568
        %588 = vst.msk [vmem:[#allocation4 + $0x80] sm:$0xff] %vm420, %v570
        %589 = vst.msk [vmem:[#allocation4 + $0x98] sm:$0xff] %vm420, %v572
        %590 = vst.msk [vmem:[#allocation4 + $0xb0] sm:$0xff] %vm420, %v574
        %s591 = scalar_lea.vmem [#allocation2], 32
        %v592 = vld [vmem:[%s591] sm:$0xff]
        %v593 = vld [vmem:[%s591 + $0x10] sm:$0xff]
        %v594 = vld [vmem:[%s591 + $0x20] sm:$0xff]
        %v595 = vld [vmem:[%s591 + $0x30] sm:$0xff]
        %v596 = vld [vmem:[%s591 + $0x40] sm:$0xff]
        %v597 = vld [vmem:[%s591 + $0x50] sm:$0xff]
        %v598 = vld [vmem:[%s591 + $0x60] sm:$0xff]
        %v599 = vld [vmem:[%s591 + $0x70] sm:$0xff]
        %608 = vrot.lane.b32.xlu0 %v592, 64
        %v609 = vpop.permute.xlu0 %608
        %610 = vrot.lane.b32.xlu0 %v593, 64
        %v611 = vpop.permute.xlu0 %610
        %612 = vrot.lane.b32.xlu0 %v594, 64
        %v613 = vpop.permute.xlu0 %612
        %614 = vrot.lane.b32.xlu0 %v595, 64
        %v615 = vpop.permute.xlu0 %614
        %616 = vrot.lane.b32.xlu0 %v596, 64
        %v617 = vpop.permute.xlu0 %616
        %618 = vrot.lane.b32.xlu0 %v597, 64
        %v619 = vpop.permute.xlu0 %618
        %620 = vrot.lane.b32.xlu0 %v598, 64
        %v621 = vpop.permute.xlu0 %620
        %622 = vrot.lane.b32.xlu0 %v599, 64
        %v623 = vpop.permute.xlu0 %622
        %632 = vst.msk [vmem:[#allocation4 + $0x8] sm:$0xff] %vm469, %v609
        %633 = vst.msk [vmem:[#allocation4 + $0x20] sm:$0xff] %vm469, %v611
        %634 = vst.msk [vmem:[#allocation4 + $0x38] sm:$0xff] %vm469, %v613
        %635 = vst.msk [vmem:[#allocation4 + $0x50] sm:$0xff] %vm469, %v615
        %636 = vst.msk [vmem:[#allocation4 + $0x68] sm:$0xff] %vm469, %v617
        %637 = vst.msk [vmem:[#allocation4 + $0x80] sm:$0xff] %vm469, %v619
        %638 = vst.msk [vmem:[#allocation4 + $0x98] sm:$0xff] %vm469, %v621
        %639 = vst.msk [vmem:[#allocation4 + $0xb0] sm:$0xff] %vm469, %v623
        %v640 = vld [vmem:[%s591 + $0x1] sm:$0xff]
        %v641 = vld [vmem:[%s591 + $0x11] sm:$0xff]
        %v642 = vld [vmem:[%s591 + $0x21] sm:$0xff]
        %v643 = vld [vmem:[%s591 + $0x31] sm:$0xff]
        %v644 = vld [vmem:[%s591 + $0x41] sm:$0xff]
        %v645 = vld [vmem:[%s591 + $0x51] sm:$0xff]
        %v646 = vld [vmem:[%s591 + $0x61] sm:$0xff]
        %v647 = vld [vmem:[%s591 + $0x71] sm:$0xff]
        %656 = vrot.lane.b32.xlu0 %v640, 96
        %v657 = vpop.permute.xlu0 %656
        %658 = vrot.lane.b32.xlu0 %v641, 96
        %v659 = vpop.permute.xlu0 %658
        %660 = vrot.lane.b32.xlu0 %v642, 96
        %v661 = vpop.permute.xlu0 %660
        %662 = vrot.lane.b32.xlu0 %v643, 96
        %v663 = vpop.permute.xlu0 %662
        %664 = vrot.lane.b32.xlu0 %v644, 96
        %v665 = vpop.permute.xlu0 %664
        %666 = vrot.lane.b32.xlu0 %v645, 96
        %v667 = vpop.permute.xlu0 %666
        %668 = vrot.lane.b32.xlu0 %v646, 96
        %v669 = vpop.permute.xlu0 %668
        %670 = vrot.lane.b32.xlu0 %v647, 96
        %v671 = vpop.permute.xlu0 %670
        %680 = vst.msk [vmem:[#allocation4 + $0x8] sm:$0xff] %vm518, %v657
        %681 = vst.msk [vmem:[#allocation4 + $0x20] sm:$0xff] %vm518, %v659
        %682 = vst.msk [vmem:[#allocation4 + $0x38] sm:$0xff] %vm518, %v661
        %683 = vst.msk [vmem:[#allocation4 + $0x50] sm:$0xff] %vm518, %v663
        %684 = vst.msk [vmem:[#allocation4 + $0x68] sm:$0xff] %vm518, %v665
        %685 = vst.msk [vmem:[#allocation4 + $0x80] sm:$0xff] %vm518, %v667
        %686 = vst.msk [vmem:[#allocation4 + $0x98] sm:$0xff] %vm518, %v669
        %687 = vst.msk [vmem:[#allocation4 + $0xb0] sm:$0xff] %vm518, %v671
        %v688 = vld [vmem:[%s591 + $0x2] sm:$0xff]
        %v689 = vld [vmem:[%s591 + $0x12] sm:$0xff]
        %v690 = vld [vmem:[%s591 + $0x22] sm:$0xff]
        %v691 = vld [vmem:[%s591 + $0x32] sm:$0xff]
        %v692 = vld [vmem:[%s591 + $0x42] sm:$0xff]
        %v693 = vld [vmem:[%s591 + $0x52] sm:$0xff]
        %v694 = vld [vmem:[%s591 + $0x62] sm:$0xff]
        %v695 = vld [vmem:[%s591 + $0x72] sm:$0xff]
        %696 = vst.msk [vmem:[#allocation4 + $0x10] sm:$0xff] %vm355, %v688
        %697 = vst.msk [vmem:[#allocation4 + $0x28] sm:$0xff] %vm355, %v689
        %698 = vst.msk [vmem:[#allocation4 + $0x40] sm:$0xff] %vm355, %v690
        %699 = vst.msk [vmem:[#allocation4 + $0x58] sm:$0xff] %vm355, %v691
        %700 = vst.msk [vmem:[#allocation4 + $0x70] sm:$0xff] %vm355, %v692
        %701 = vst.msk [vmem:[#allocation4 + $0x88] sm:$0xff] %vm355, %v693
        %702 = vst.msk [vmem:[#allocation4 + $0xa0] sm:$0xff] %vm355, %v694
        %703 = vst.msk [vmem:[#allocation4 + $0xb8] sm:$0xff] %vm355, %v695
        %v704 = vld [vmem:[#allocation4] sm:$0xff]
        %v705 = vld [vmem:[#allocation4 + $0x8] sm:$0xff]
        %v706 = vld [vmem:[#allocation4 + $0x10] sm:$0xff]
        %v707 = vld [vmem:[#allocation4 + $0x18] sm:$0xff]
        %v708 = vld [vmem:[#allocation4 + $0x20] sm:$0xff]
        %v709 = vld [vmem:[#allocation4 + $0x28] sm:$0xff]
        %v710 = vld [vmem:[#allocation4 + $0x30] sm:$0xff]
        %v711 = vld [vmem:[#allocation4 + $0x38] sm:$0xff]
        %v712 = vld [vmem:[#allocation4 + $0x40] sm:$0xff]
        %v713 = vld [vmem:[#allocation4 + $0x48] sm:$0xff]
        %v714 = vld [vmem:[#allocation4 + $0x50] sm:$0xff]
        %v715 = vld [vmem:[#allocation4 + $0x58] sm:$0xff]
        %v716 = vld [vmem:[#allocation4 + $0x60] sm:$0xff]
        %v717 = vld [vmem:[#allocation4 + $0x68] sm:$0xff]
        %v718 = vld [vmem:[#allocation4 + $0x70] sm:$0xff]
        %v719 = vld [vmem:[#allocation4 + $0x78] sm:$0xff]
        %v720 = vld [vmem:[#allocation4 + $0x80] sm:$0xff]
        %v721 = vld [vmem:[#allocation4 + $0x88] sm:$0xff]
        %v722 = vld [vmem:[#allocation4 + $0x90] sm:$0xff]
        %v723 = vld [vmem:[#allocation4 + $0x98] sm:$0xff]
        %v724 = vld [vmem:[#allocation4 + $0xa0] sm:$0xff]
        %v725 = vld [vmem:[#allocation4 + $0xa8] sm:$0xff]
        %v726 = vld [vmem:[#allocation4 + $0xb0] sm:$0xff]
        %v727 = vld [vmem:[#allocation4 + $0xb8] sm:$0xff]
        %v728 = vpack.c.bf16 %v707, %v704
        %v729 = vpack.c.bf16 %v708, %v705
        %v730 = vpack.c.bf16 %v709, %v706
        %v731 = vpack.c.bf16 %v713, %v710
        %v732 = vpack.c.bf16 %v714, %v711
        %v733 = vpack.c.bf16 %v715, %v712
        %v734 = vpack.c.bf16 %v719, %v716
        %v735 = vpack.c.bf16 %v720, %v717
        %v736 = vpack.c.bf16 %v721, %v718
        %v737 = vpack.c.bf16 %v725, %v722
        %v738 = vpack.c.bf16 %v726, %v723
        %v739 = vpack.c.bf16 %v727, %v724
        %v740 = vld [vmem:[%s1] sm:$0xf]
        %v741 = vld [vmem:[%s1 + $0x4] sm:$0xf]
        %v742 = vld [vmem:[%s1 + $0x8] sm:$0xf]
        %v743 = vld [vmem:[%s1 + $0xc] sm:$0xf]
        %v744 = vld [vmem:[%s1 + $0x10] sm:$0xf]
        %v745 = vld [vmem:[%s1 + $0x14] sm:$0xf]
        %v746 = vld [vmem:[%s1 + $0x18] sm:$0xf]
        %v747 = vld [vmem:[%s1 + $0x1c] sm:$0xf]
        %v748 = vld [vmem:[%s1 + $0x20] sm:$0xf]
        %v749 = vld [vmem:[%s1 + $0x24] sm:$0xf]
        %v750 = vld [vmem:[%s1 + $0x28] sm:$0xf]
        %v751 = vld [vmem:[%s1 + $0x2c] sm:$0xf]
        %v752 = vld [vmem:[%s1 + $0x30] sm:$0xf]
        %v753 = vld [vmem:[%s1 + $0x34] sm:$0xf]
        %v754 = vld [vmem:[%s1 + $0x38] sm:$0xf]
        %v755 = vld [vmem:[%s1 + $0x3c] sm:$0xf]
        %v756 = vld [vmem:[%s1 + $0x40] sm:$0xf]
        %v757 = vld [vmem:[%s1 + $0x44] sm:$0xf]
        %v758 = vld [vmem:[%s1 + $0x48] sm:$0xf]
        %v759 = vld [vmem:[%s1 + $0x4c] sm:$0xf]
        %v760 = vld [vmem:[%s1 + $0x50] sm:$0xf]
        %v761 = vld [vmem:[%s1 + $0x54] sm:$0xf]
        %v762 = vld [vmem:[%s1 + $0x58] sm:$0xf]
        %v763 = vld [vmem:[%s1 + $0x5c] sm:$0xf]
        %v764 = vld [vmem:[%s1 + $0x60] sm:$0xf]
        %v765 = vld [vmem:[%s1 + $0x64] sm:$0xf]
        %v766 = vld [vmem:[%s1 + $0x68] sm:$0xf]
        %v767 = vld [vmem:[%s1 + $0x6c] sm:$0xf]
        %v768 = vld [vmem:[%s1 + $0x70] sm:$0xf]
        %v769 = vld [vmem:[%s1 + $0x74] sm:$0xf]
        %v770 = vld [vmem:[%s1 + $0x78] sm:$0xf]
        %v771 = vld [vmem:[%s1 + $0x7c] sm:$0xf]
        %v772 = vld [vmem:[%s1 + $0x80] sm:$0xf]
        %v773 = vld [vmem:[%s1 + $0x84] sm:$0xf]
        %v774 = vld [vmem:[%s1 + $0x88] sm:$0xf]
        %v775 = vld [vmem:[%s1 + $0x8c] sm:$0xf]
        %v812 = vunpack.c.l.b16 %v740
        %v813 = vunpack.c.l.b16 %v741
        %v814 = vunpack.c.l.b16 %v742
        %v815 = vunpack.c.l.b16 %v743
        %v816 = vunpack.c.l.b16 %v744
        %v817 = vunpack.c.l.b16 %v745
        %v818 = vunpack.c.l.b16 %v746
        %v819 = vunpack.c.l.b16 %v747
        %v820 = vunpack.c.l.b16 %v748
        %v821 = vunpack.c.l.b16 %v749
        %v822 = vunpack.c.l.b16 %v750
        %v823 = vunpack.c.l.b16 %v751
        %v824 = vunpack.c.l.b16 %v752
        %v825 = vunpack.c.l.b16 %v753
        %v826 = vunpack.c.l.b16 %v754
        %v827 = vunpack.c.l.b16 %v755
        %v828 = vunpack.c.l.b16 %v756
        %v829 = vunpack.c.l.b16 %v757
        %v830 = vunpack.c.l.b16 %v758
        %v831 = vunpack.c.l.b16 %v759
        %v832 = vunpack.c.l.b16 %v760
        %v833 = vunpack.c.l.b16 %v761
        %v834 = vunpack.c.l.b16 %v762
        %v835 = vunpack.c.l.b16 %v763
        %v836 = vunpack.c.l.b16 %v764
        %v837 = vunpack.c.l.b16 %v765
        %v838 = vunpack.c.l.b16 %v766
        %v839 = vunpack.c.l.b16 %v767
        %v840 = vunpack.c.l.b16 %v768
        %v841 = vunpack.c.l.b16 %v769
        %v842 = vunpack.c.l.b16 %v770
        %v843 = vunpack.c.l.b16 %v771
        %v844 = vunpack.c.l.b16 %v772
        %v845 = vunpack.c.l.b16 %v773
        %v846 = vunpack.c.l.b16 %v774
        %v847 = vunpack.c.l.b16 %v775
        %v848 = vpack.c.b16 %v813, %v812
        %v849 = vpack.c.b16 %v815, %v814
        %v850 = vpack.c.b16 %v817, %v816
        %v851 = vpack.c.b16 %v819, %v818
        %v852 = vpack.c.b16 %v821, %v820
        %v853 = vpack.c.b16 %v823, %v822
        %v854 = vpack.c.b16 %v825, %v824
        %v855 = vpack.c.b16 %v827, %v826
        %v856 = vpack.c.b16 %v829, %v828
        %v857 = vpack.c.b16 %v831, %v830
        %v858 = vpack.c.b16 %v833, %v832
        %v859 = vpack.c.b16 %v835, %v834
        %v860 = vpack.c.b16 %v837, %v836
        %v861 = vpack.c.b16 %v839, %v838
        %v862 = vpack.c.b16 %v841, %v840
        %v863 = vpack.c.b16 %v843, %v842
        %v864 = vpack.c.b16 %v845, %v844
        %v865 = vpack.c.b16 %v847, %v846
        %v885 = vsel %vm355, %v730, 0
        %v888 = vsel %vm355, %v733, 0
        %v891 = vsel %vm355, %v736, 0
        %v894 = vsel %vm355, %v739, 0
        %896 = vmatprep.subr.bf16.mxu0 0
        %897 = vmatpush1.bf16.msra.mxu0 %v848
        %898 = vmatprep.subr.bf16.mxu0 0
        %899 = vmatpush1.bf16.msra.mxu0 %v849
        %900 = vmatprep.subr.bf16.mxu0 0
        %901 = vmatpush1.bf16.msra.mxu0 %v850
        %902 = vmatprep.subr.bf16.mxu0 0
        %903 = vmatpush1.bf16.msra.mxu0 %v851
        %904 = vmatprep.subr.bf16.mxu0 0
        %905 = vmatpush1.bf16.msra.mxu0 %v852
        %906 = vmatprep.subr.bf16.mxu0 0
        %907 = vmatpush1.bf16.msra.mxu0 %v853
        %908 = vmatprep.subr.bf16.mxu0 0
        %909 = vmatpush1.bf16.msra.mxu0 %v854
        %910 = vmatprep.subr.bf16.mxu0 0
        %911 = vmatpush1.bf16.msra.mxu0 %v855
        %912 = vmatprep.subr.bf16.mxu0 0
        %913 = vmatpush1.bf16.msra.mxu0 %v856
        %914 = vmatprep.subr.bf16.mxu0 0
        %915 = vmatpush1.bf16.msra.mxu0 %v857
        %916 = vmatprep.subr.bf16.mxu0 0
        %917 = vmatpush1.bf16.msra.mxu0 %v858
        %918 = vmatprep.subr.bf16.mxu0 0
        %919 = vmatpush1.bf16.msra.mxu0 %v859
        %920 = vmatprep.subr.bf16.mxu0 0
        %921 = vmatpush1.bf16.msra.mxu0 %v860
        %922 = vmatprep.subr.bf16.mxu0 0
        %923 = vmatpush1.bf16.msra.mxu0 %v861
        %924 = vmatprep.subr.bf16.mxu0 0
        %925 = vmatpush1.bf16.msra.mxu0 %v862
        %926 = vmatprep.subr.bf16.mxu0 0
        %927 = vmatpush1.bf16.msra.mxu0 %v863
        %928 = vmatprep.mubr.bf16.mxu0 %v729
        %929 = vmatmul.mubr.bf16.gmra.mrb[0].mxu0 %v728
        %v930 = vpop.f32.mrb[0].mxu0
        %v931 = vadd.f32 0.0, %v930
        %v932 = vpop.f32.mrb[0].mxu0
        %v933 = vpop.f32.mrb[0].mxu0
        %v934 = vadd.f32 0.0, %v933
        %v935 = vpop.f32.mrb[0].mxu0
        %936 = vmatprep.mubr.bf16.mxu0 %v732
        %937 = vmatmul.mubr.bf16.gmra.mrb[0].mxu0 %v731
        %v938 = vpop.f32.mrb[0].mxu0
        %v939 = vadd.f32 0.0, %v938
        %v940 = vpop.f32.mrb[0].mxu0
        %v941 = vpop.f32.mrb[0].mxu0
        %v942 = vadd.f32 0.0, %v941
        %v943 = vpop.f32.mrb[0].mxu0
        %944 = vmatprep.mubr.bf16.mxu0 %v735
        %945 = vmatmul.mubr.bf16.gmra.mrb[0].mxu0 %v734
        %v946 = vpop.f32.mrb[0].mxu0
        %v947 = vadd.f32 0.0, %v946
        %v948 = vpop.f32.mrb[0].mxu0
        %v949 = vpop.f32.mrb[0].mxu0
        %v950 = vadd.f32 0.0, %v949
        %v951 = vpop.f32.mrb[0].mxu0
        %952 = vmatprep.mubr.bf16.mxu0 %v738
        %953 = vmatmul.mubr.bf16.gmra.mrb[0].mxu0 %v737
        %v954 = vpop.f32.mrb[0].mxu0
        %v955 = vadd.f32 0.0, %v954
        %v956 = vpop.f32.mrb[0].mxu0
        %v957 = vpop.f32.mrb[0].mxu0
        %v958 = vadd.f32 0.0, %v957
        %v959 = vpop.f32.mrb[0].mxu0
        %960 = vdwg.mxu0
        %961 = vmatprep.subr.bf16.mxu0 0
        %962 = vmatpush1.bf16.msra.mxu0 %v864
        %963 = vmatprep.subr.bf16.mxu0 0
        %964 = vmatpush1.bf16.msra.mxu0 %v865
        %965 = vmatprep.subr.bf16.mxu0 0
        %966 = vmatpush1.bf16.msra.mxu0 0
        %967 = vmatprep.subr.bf16.mxu0 0
        %968 = vmatpush1.bf16.msra.mxu0 0
        %969 = vmatprep.subr.bf16.mxu0 0
        %970 = vmatpush1.bf16.msra.mxu0 0
        %971 = vmatprep.subr.bf16.mxu0 0
        %972 = vmatpush1.bf16.msra.mxu0 0
        %973 = vmatprep.subr.bf16.mxu0 0
        %974 = vmatpush1.bf16.msra.mxu0 0
        %975 = vmatprep.subr.bf16.mxu0 0
        %976 = vmatpush1.bf16.msra.mxu0 0
        %977 = vmatprep.subr.bf16.mxu0 0
        %978 = vmatpush1.bf16.msra.mxu0 0
        %979 = vmatprep.subr.bf16.mxu0 0
        %980 = vmatpush1.bf16.msra.mxu0 0
        %981 = vmatprep.subr.bf16.mxu0 0
        %982 = vmatpush1.bf16.msra.mxu0 0
        %983 = vmatprep.subr.bf16.mxu0 0
        %984 = vmatpush1.bf16.msra.mxu0 0
        %985 = vmatprep.subr.bf16.mxu0 0
        %986 = vmatpush1.bf16.msra.mxu0 0
        %987 = vmatprep.subr.bf16.mxu0 0
        %988 = vmatpush1.bf16.msra.mxu0 0
        %989 = vmatprep.subr.bf16.mxu0 0
        %990 = vmatpush1.bf16.msra.mxu0 0
        %991 = vmatprep.subr.bf16.mxu0 0
        %992 = vmatpush1.bf16.msra.mxu0 0
        %993 = vmatprep.mubr.bf16.mxu0 0
        %994 = vmatmul.mubr.bf16.gmra.mrb[0].mxu0 %v885
        %v995 = vpop.f32.mrb[0].mxu0
        %v996 = vadd.f32 %v931, %v995
        %v997 = vpop.f32.mrb[0].mxu0
        %v998 = vpop.f32.mrb[0].mxu0
        %v999 = vadd.f32 %v934, %v998
        %v1000 = vpop.f32.mrb[0].mxu0
        %1001 = vmatprep.mubr.bf16.mxu0 0
        %1002 = vmatmul.mubr.bf16.gmra.mrb[0].mxu0 %v888
        %v1003 = vpop.f32.mrb[0].mxu0
        %v1004 = vadd.f32 %v939, %v1003
        %v1005 = vpop.f32.mrb[0].mxu0
        %v1006 = vpop.f32.mrb[0].mxu0
        %v1007 = vadd.f32 %v942, %v1006
        %v1008 = vpop.f32.mrb[0].mxu0
        %1009 = vmatprep.mubr.bf16.mxu0 0
        %1010 = vmatmul.mubr.bf16.gmra.mrb[0].mxu0 %v891
        %v1011 = vpop.f32.mrb[0].mxu0
        %v1012 = vadd.f32 %v947, %v1011
        %v1013 = vpop.f32.mrb[0].mxu0
        %v1014 = vpop.f32.mrb[0].mxu0
        %v1015 = vadd.f32 %v950, %v1014
        %v1016 = vpop.f32.mrb[0].mxu0
        %1017 = vmatprep.mubr.bf16.mxu0 0
        %1018 = vmatmul.mubr.bf16.gmra.mrb[0].mxu0 %v894
        %v1019 = vpop.f32.mrb[0].mxu0
        %v1020 = vadd.f32 %v955, %v1019
        %v1021 = vpop.f32.mrb[0].mxu0
        %v1022 = vpop.f32.mrb[0].mxu0
        %v1023 = vadd.f32 %v958, %v1022
        %v1024 = vpop.f32.mrb[0].mxu0
        %1025 = vdwg.mxu0
        %v1026 = vld [vmem:[%s2] sm:$0x1]
        %v1028 = vlaneseq
        %v1029 = vshrl.u32 %v1028, 7
        %v1030 = vsub.s32 0, %v1029
        %v1031 = vrot.slane %v1026, %v1030
        %v1033 = vmul.f32 %v996, %v1031
        %v1034 = vmul.f32 %v999, %v1031
        %v1035 = vmul.f32 %v1004, %v1031
        %v1036 = vmul.f32 %v1007, %v1031
        %v1037 = vmul.f32 %v1012, %v1031
        %v1038 = vmul.f32 %v1015, %v1031
        %v1039 = vmul.f32 %v1020, %v1031
        %v1040 = vmul.f32 %v1023, %v1031
        %v1041 = vld [vmem:[%s3] sm:$0x1]
        %v1043 = vlaneseq
        %v1044 = vshrl.u32 %v1043, 7
        %v1045 = vsub.s32 0, %v1044
        %v1046 = vrot.slane %v1041, %v1045
        %v1048 = vadd.f32 %v1033, %v1046
        %v1049 = vadd.f32 %v1034, %v1046
        %v1050 = vadd.f32 %v1035, %v1046
        %v1051 = vadd.f32 %v1036, %v1046
        %v1052 = vadd.f32 %v1037, %v1046
        %v1053 = vadd.f32 %v1038, %v1046
        %v1054 = vadd.f32 %v1039, %v1046
        %v1055 = vadd.f32 %v1040, %v1046
        %v1056 = vmax.f32 %v1048, 0.0
        %v1057 = vmax.f32 %v1049, 0.0
        %v1058 = vmax.f32 %v1050, 0.0
        %v1059 = vmax.f32 %v1051, 0.0
        %v1060 = vmax.f32 %v1052, 0.0
        %v1061 = vmax.f32 %v1053, 0.0
        %v1062 = vmax.f32 %v1054, 0.0
        %v1063 = vmax.f32 %v1055, 0.0
        %s1064 = scalar_lea.vmem [#allocation3], 16
        %1065 = vst.msk [vmem:[%s1064 + $0x1] sm:$0xff] %vm355, %v1056
        %1066 = vst.msk [vmem:[%s1064 + $0x11] sm:$0xff] %vm355, %v1057
        %1067 = vst.msk [vmem:[%s1064 + $0x21] sm:$0xff] %vm355, %v1058
        %1068 = vst.msk [vmem:[%s1064 + $0x31] sm:$0xff] %vm355, %v1059
        %1069 = vst.msk [vmem:[%s1064 + $0x41] sm:$0xff] %vm355, %v1060
        %1070 = vst.msk [vmem:[%s1064 + $0x51] sm:$0xff] %vm355, %v1061
        %1071 = vst.msk [vmem:[%s1064 + $0x61] sm:$0xff] %vm355, %v1062
        %1072 = vst.msk [vmem:[%s1064 + $0x71] sm:$0xff] %vm355, %v1063
        %v1073 = vld [vmem:[#allocation3] sm:$0xff]
        %v1074 = vld [vmem:[#allocation3 + $0x10] sm:$0xff]
        %v1075 = vld [vmem:[#allocation3 + $0x20] sm:$0xff]
        %v1076 = vld [vmem:[#allocation3 + $0x30] sm:$0xff]
        %v1077 = vld [vmem:[#allocation3 + $0x40] sm:$0xff]
        %v1078 = vld [vmem:[#allocation3 + $0x50] sm:$0xff]
        %v1079 = vld [vmem:[#allocation3 + $0x60] sm:$0xff]
        %v1080 = vld [vmem:[#allocation3 + $0x70] sm:$0xff]
        %1081 = vst.msk [vmem:[#allocation4] sm:$0xff] %vm355, %v1073
        %1082 = vst.msk [vmem:[#allocation4 + $0x18] sm:$0xff] %vm355, %v1074
        %1083 = vst.msk [vmem:[#allocation4 + $0x30] sm:$0xff] %vm355, %v1075
        %1084 = vst.msk [vmem:[#allocation4 + $0x48] sm:$0xff] %vm355, %v1076
        %1085 = vst.msk [vmem:[#allocation4 + $0x60] sm:$0xff] %vm355, %v1077
        %1086 = vst.msk [vmem:[#allocation4 + $0x78] sm:$0xff] %vm355, %v1078
        %1087 = vst.msk [vmem:[#allocation4 + $0x90] sm:$0xff] %vm355, %v1079
        %1088 = vst.msk [vmem:[#allocation4 + $0xa8] sm:$0xff] %vm355, %v1080
        %v1089 = vld [vmem:[#allocation3 + $0x1] sm:$0xff]
        %v1090 = vld [vmem:[#allocation3 + $0x11] sm:$0xff]
        %v1091 = vld [vmem:[#allocation3 + $0x21] sm:$0xff]
        %v1092 = vld [vmem:[#allocation3 + $0x31] sm:$0xff]
        %v1093 = vld [vmem:[#allocation3 + $0x41] sm:$0xff]
        %v1094 = vld [vmem:[#allocation3 + $0x51] sm:$0xff]
        %v1095 = vld [vmem:[#allocation3 + $0x61] sm:$0xff]
        %v1096 = vld [vmem:[#allocation3 + $0x71] sm:$0xff]
        %1105 = vrot.lane.b32.xlu0 %v1089, 32
        %v1106 = vpop.permute.xlu0 %1105
        %1107 = vrot.lane.b32.xlu0 %v1090, 32
        %v1108 = vpop.permute.xlu0 %1107
        %1109 = vrot.lane.b32.xlu0 %v1091, 32
        %v1110 = vpop.permute.xlu0 %1109
        %1111 = vrot.lane.b32.xlu0 %v1092, 32
        %v1112 = vpop.permute.xlu0 %1111
        %1113 = vrot.lane.b32.xlu0 %v1093, 32
        %v1114 = vpop.permute.xlu0 %1113
        %1115 = vrot.lane.b32.xlu0 %v1094, 32
        %v1116 = vpop.permute.xlu0 %1115
        %1117 = vrot.lane.b32.xlu0 %v1095, 32
        %v1118 = vpop.permute.xlu0 %1117
        %1119 = vrot.lane.b32.xlu0 %v1096, 32
        %v1120 = vpop.permute.xlu0 %1119
        %1129 = vst.msk [vmem:[#allocation4] sm:$0xff] %vm420, %v1106
        %1130 = vst.msk [vmem:[#allocation4 + $0x18] sm:$0xff] %vm420, %v1108
        %1131 = vst.msk [vmem:[#allocation4 + $0x30] sm:$0xff] %vm420, %v1110
        %1132 = vst.msk [vmem:[#allocation4 + $0x48] sm:$0xff] %vm420, %v1112
        %1133 = vst.msk [vmem:[#allocation4 + $0x60] sm:$0xff] %vm420, %v1114
        %1134 = vst.msk [vmem:[#allocation4 + $0x78] sm:$0xff] %vm420, %v1116
        %1135 = vst.msk [vmem:[#allocation4 + $0x90] sm:$0xff] %vm420, %v1118
        %1136 = vst.msk [vmem:[#allocation4 + $0xa8] sm:$0xff] %vm420, %v1120
        %v1137 = vld [vmem:[#allocation3 + $0x2] sm:$0xff]
        %v1138 = vld [vmem:[#allocation3 + $0x12] sm:$0xff]
        %v1139 = vld [vmem:[#allocation3 + $0x22] sm:$0xff]
        %v1140 = vld [vmem:[#allocation3 + $0x32] sm:$0xff]
        %v1141 = vld [vmem:[#allocation3 + $0x42] sm:$0xff]
        %v1142 = vld [vmem:[#allocation3 + $0x52] sm:$0xff]
        %v1143 = vld [vmem:[#allocation3 + $0x62] sm:$0xff]
        %v1144 = vld [vmem:[#allocation3 + $0x72] sm:$0xff]
        %1153 = vrot.lane.b32.xlu0 %v1137, 64
        %v1154 = vpop.permute.xlu0 %1153
        %1155 = vrot.lane.b32.xlu0 %v1138, 64
        %v1156 = vpop.permute.xlu0 %1155
        %1157 = vrot.lane.b32.xlu0 %v1139, 64
        %v1158 = vpop.permute.xlu0 %1157
        %1159 = vrot.lane.b32.xlu0 %v1140, 64
        %v1160 = vpop.permute.xlu0 %1159
        %1161 = vrot.lane.b32.xlu0 %v1141, 64
        %v1162 = vpop.permute.xlu0 %1161
        %1163 = vrot.lane.b32.xlu0 %v1142, 64
        %v1164 = vpop.permute.xlu0 %1163
        %1165 = vrot.lane.b32.xlu0 %v1143, 64
        %v1166 = vpop.permute.xlu0 %1165
        %1167 = vrot.lane.b32.xlu0 %v1144, 64
        %v1168 = vpop.permute.xlu0 %1167
        %1177 = vst.msk [vmem:[#allocation4] sm:$0xff] %vm469, %v1154
        %1178 = vst.msk [vmem:[#allocation4 + $0x18] sm:$0xff] %vm469, %v1156
        %1179 = vst.msk [vmem:[#allocation4 + $0x30] sm:$0xff] %vm469, %v1158
        %1180 = vst.msk [vmem:[#allocation4 + $0x48] sm:$0xff] %vm469, %v1160
        %1181 = vst.msk [vmem:[#allocation4 + $0x60] sm:$0xff] %vm469, %v1162
        %1182 = vst.msk [vmem:[#allocation4 + $0x78] sm:$0xff] %vm469, %v1164
        %1183 = vst.msk [vmem:[#allocation4 + $0x90] sm:$0xff] %vm469, %v1166
        %1184 = vst.msk [vmem:[#allocation4 + $0xa8] sm:$0xff] %vm469, %v1168
        %v1185 = vld [vmem:[%s1064] sm:$0xff]
        %v1186 = vld [vmem:[%s1064 + $0x10] sm:$0xff]
        %v1187 = vld [vmem:[%s1064 + $0x20] sm:$0xff]
        %v1188 = vld [vmem:[%s1064 + $0x30] sm:$0xff]
        %v1189 = vld [vmem:[%s1064 + $0x40] sm:$0xff]
        %v1190 = vld [vmem:[%s1064 + $0x50] sm:$0xff]
        %v1191 = vld [vmem:[%s1064 + $0x60] sm:$0xff]
        %v1192 = vld [vmem:[%s1064 + $0x70] sm:$0xff]
        %1201 = vrot.lane.b32.xlu0 %v1185, 96
        %v1202 = vpop.permute.xlu0 %1201
        %1203 = vrot.lane.b32.xlu0 %v1186, 96
        %v1204 = vpop.permute.xlu0 %1203
        %1205 = vrot.lane.b32.xlu0 %v1187, 96
        %v1206 = vpop.permute.xlu0 %1205
        %1207 = vrot.lane.b32.xlu0 %v1188, 96
        %v1208 = vpop.permute.xlu0 %1207
        %1209 = vrot.lane.b32.xlu0 %v1189, 96
        %v1210 = vpop.permute.xlu0 %1209
        %1211 = vrot.lane.b32.xlu0 %v1190, 96
        %v1212 = vpop.permute.xlu0 %1211
        %1213 = vrot.lane.b32.xlu0 %v1191, 96
        %v1214 = vpop.permute.xlu0 %1213
        %1215 = vrot.lane.b32.xlu0 %v1192, 96
        %v1216 = vpop.permute.xlu0 %1215
        %1225 = vst.msk [vmem:[#allocation4] sm:$0xff] %vm518, %v1202
        %1226 = vst.msk [vmem:[#allocation4 + $0x18] sm:$0xff] %vm518, %v1204
        %1227 = vst.msk [vmem:[#allocation4 + $0x30] sm:$0xff] %vm518, %v1206
        %1228 = vst.msk [vmem:[#allocation4 + $0x48] sm:$0xff] %vm518, %v1208
        %1229 = vst.msk [vmem:[#allocation4 + $0x60] sm:$0xff] %vm518, %v1210
        %1230 = vst.msk [vmem:[#allocation4 + $0x78] sm:$0xff] %vm518, %v1212
        %1231 = vst.msk [vmem:[#allocation4 + $0x90] sm:$0xff] %vm518, %v1214
        %1232 = vst.msk [vmem:[#allocation4 + $0xa8] sm:$0xff] %vm518, %v1216
        %v1233 = vld [vmem:[%s1064 + $0x1] sm:$0xff]
        %v1234 = vld [vmem:[%s1064 + $0x11] sm:$0xff]
        %v1235 = vld [vmem:[%s1064 + $0x21] sm:$0xff]
        %v1236 = vld [vmem:[%s1064 + $0x31] sm:$0xff]
        %v1237 = vld [vmem:[%s1064 + $0x41] sm:$0xff]
        %v1238 = vld [vmem:[%s1064 + $0x51] sm:$0xff]
        %v1239 = vld [vmem:[%s1064 + $0x61] sm:$0xff]
        %v1240 = vld [vmem:[%s1064 + $0x71] sm:$0xff]
        %1241 = vst.msk [vmem:[#allocation4 + $0x8] sm:$0xff] %vm355, %v1233
        %1242 = vst.msk [vmem:[#allocation4 + $0x20] sm:$0xff] %vm355, %v1234
        %1243 = vst.msk [vmem:[#allocation4 + $0x38] sm:$0xff] %vm355, %v1235
        %1244 = vst.msk [vmem:[#allocation4 + $0x50] sm:$0xff] %vm355, %v1236
        %1245 = vst.msk [vmem:[#allocation4 + $0x68] sm:$0xff] %vm355, %v1237
        %1246 = vst.msk [vmem:[#allocation4 + $0x80] sm:$0xff] %vm355, %v1238
        %1247 = vst.msk [vmem:[#allocation4 + $0x98] sm:$0xff] %vm355, %v1239
        %1248 = vst.msk [vmem:[#allocation4 + $0xb0] sm:$0xff] %vm355, %v1240
        %v1249 = vld [vmem:[%s1064 + $0x2] sm:$0xff]
        %v1250 = vld [vmem:[%s1064 + $0x12] sm:$0xff]
        %v1251 = vld [vmem:[%s1064 + $0x22] sm:$0xff]
        %v1252 = vld [vmem:[%s1064 + $0x32] sm:$0xff]
        %v1253 = vld [vmem:[%s1064 + $0x42] sm:$0xff]
        %v1254 = vld [vmem:[%s1064 + $0x52] sm:$0xff]
        %v1255 = vld [vmem:[%s1064 + $0x62] sm:$0xff]
        %v1256 = vld [vmem:[%s1064 + $0x72] sm:$0xff]
        %1265 = vrot.lane.b32.xlu0 %v1249, 32
        %v1266 = vpop.permute.xlu0 %1265
        %1267 = vrot.lane.b32.xlu0 %v1250, 32
        %v1268 = vpop.permute.xlu0 %1267
        %1269 = vrot.lane.b32.xlu0 %v1251, 32
        %v1270 = vpop.permute.xlu0 %1269
        %1271 = vrot.lane.b32.xlu0 %v1252, 32
        %v1272 = vpop.permute.xlu0 %1271
        %1273 = vrot.lane.b32.xlu0 %v1253, 32
        %v1274 = vpop.permute.xlu0 %1273
        %1275 = vrot.lane.b32.xlu0 %v1254, 32
        %v1276 = vpop.permute.xlu0 %1275
        %1277 = vrot.lane.b32.xlu0 %v1255, 32
        %v1278 = vpop.permute.xlu0 %1277
        %1279 = vrot.lane.b32.xlu0 %v1256, 32
        %v1280 = vpop.permute.xlu0 %1279
        %1289 = vst.msk [vmem:[#allocation4 + $0x8] sm:$0xff] %vm420, %v1266
        %1290 = vst.msk [vmem:[#allocation4 + $0x20] sm:$0xff] %vm420, %v1268
        %1291 = vst.msk [vmem:[#allocation4 + $0x38] sm:$0xff] %vm420, %v1270
        %1292 = vst.msk [vmem:[#allocation4 + $0x50] sm:$0xff] %vm420, %v1272
        %1293 = vst.msk [vmem:[#allocation4 + $0x68] sm:$0xff] %vm420, %v1274
        %1294 = vst.msk [vmem:[#allocation4 + $0x80] sm:$0xff] %vm420, %v1276
        %1295 = vst.msk [vmem:[#allocation4 + $0x98] sm:$0xff] %vm420, %v1278
        %1296 = vst.msk [vmem:[#allocation4 + $0xb0] sm:$0xff] %vm420, %v1280
        %s1297 = scalar_lea.vmem [#allocation3], 32
        %v1298 = vld [vmem:[%s1297] sm:$0xff]
        %v1299 = vld [vmem:[%s1297 + $0x10] sm:$0xff]
        %v1300 = vld [vmem:[%s1297 + $0x20] sm:$0xff]
        %v1301 = vld [vmem:[%s1297 + $0x30] sm:$0xff]
        %v1302 = vld [vmem:[%s1297 + $0x40] sm:$0xff]
        %v1303 = vld [vmem:[%s1297 + $0x50] sm:$0xff]
        %v1304 = vld [vmem:[%s1297 + $0x60] sm:$0xff]
        %v1305 = vld [vmem:[%s1297 + $0x70] sm:$0xff]
        %1314 = vrot.lane.b32.xlu0 %v1298, 64
        %v1315 = vpop.permute.xlu0 %1314
        %1316 = vrot.lane.b32.xlu0 %v1299, 64
        %v1317 = vpop.permute.xlu0 %1316
        %1318 = vrot.lane.b32.xlu0 %v1300, 64
        %v1319 = vpop.permute.xlu0 %1318
        %1320 = vrot.lane.b32.xlu0 %v1301, 64
        %v1321 = vpop.permute.xlu0 %1320
        %1322 = vrot.lane.b32.xlu0 %v1302, 64
        %v1323 = vpop.permute.xlu0 %1322
        %1324 = vrot.lane.b32.xlu0 %v1303, 64
        %v1325 = vpop.permute.xlu0 %1324
        %1326 = vrot.lane.b32.xlu0 %v1304, 64
        %v1327 = vpop.permute.xlu0 %1326
        %1328 = vrot.lane.b32.xlu0 %v1305, 64
        %v1329 = vpop.permute.xlu0 %1328
        %1338 = vst.msk [vmem:[#allocation4 + $0x8] sm:$0xff] %vm469, %v1315
        %1339 = vst.msk [vmem:[#allocation4 + $0x20] sm:$0xff] %vm469, %v1317
        %1340 = vst.msk [vmem:[#allocation4 + $0x38] sm:$0xff] %vm469, %v1319
        %1341 = vst.msk [vmem:[#allocation4 + $0x50] sm:$0xff] %vm469, %v1321
        %1342 = vst.msk [vmem:[#allocation4 + $0x68] sm:$0xff] %vm469, %v1323
        %1343 = vst.msk [vmem:[#allocation4 + $0x80] sm:$0xff] %vm469, %v1325
        %1344 = vst.msk [vmem:[#allocation4 + $0x98] sm:$0xff] %vm469, %v1327
        %1345 = vst.msk [vmem:[#allocation4 + $0xb0] sm:$0xff] %vm469, %v1329
        %v1346 = vld [vmem:[%s1297 + $0x1] sm:$0xff]
        %v1347 = vld [vmem:[%s1297 + $0x11] sm:$0xff]
        %v1348 = vld [vmem:[%s1297 + $0x21] sm:$0xff]
        %v1349 = vld [vmem:[%s1297 + $0x31] sm:$0xff]
        %v1350 = vld [vmem:[%s1297 + $0x41] sm:$0xff]
        %v1351 = vld [vmem:[%s1297 + $0x51] sm:$0xff]
        %v1352 = vld [vmem:[%s1297 + $0x61] sm:$0xff]
        %v1353 = vld [vmem:[%s1297 + $0x71] sm:$0xff]
        %1362 = vrot.lane.b32.xlu0 %v1346, 96
        %v1363 = vpop.permute.xlu0 %1362
        %1364 = vrot.lane.b32.xlu0 %v1347, 96
        %v1365 = vpop.permute.xlu0 %1364
        %1366 = vrot.lane.b32.xlu0 %v1348, 96
        %v1367 = vpop.permute.xlu0 %1366
        %1368 = vrot.lane.b32.xlu0 %v1349, 96
        %v1369 = vpop.permute.xlu0 %1368
        %1370 = vrot.lane.b32.xlu0 %v1350, 96
        %v1371 = vpop.permute.xlu0 %1370
        %1372 = vrot.lane.b32.xlu0 %v1351, 96
        %v1373 = vpop.permute.xlu0 %1372
        %1374 = vrot.lane.b32.xlu0 %v1352, 96
        %v1375 = vpop.permute.xlu0 %1374
        %1376 = vrot.lane.b32.xlu0 %v1353, 96
        %v1377 = vpop.permute.xlu0 %1376
        %1386 = vst.msk [vmem:[#allocation4 + $0x8] sm:$0xff] %vm518, %v1363
        %1387 = vst.msk [vmem:[#allocation4 + $0x20] sm:$0xff] %vm518, %v1365
        %1388 = vst.msk [vmem:[#allocation4 + $0x38] sm:$0xff] %vm518, %v1367
        %1389 = vst.msk [vmem:[#allocation4 + $0x50] sm:$0xff] %vm518, %v1369
        %1390 = vst.msk [vmem:[#allocation4 + $0x68] sm:$0xff] %vm518, %v1371
        %1391 = vst.msk [vmem:[#allocation4 + $0x80] sm:$0xff] %vm518, %v1373
        %1392 = vst.msk [vmem:[#allocation4 + $0x98] sm:$0xff] %vm518, %v1375
        %1393 = vst.msk [vmem:[#allocation4 + $0xb0] sm:$0xff] %vm518, %v1377
        %v1394 = vld [vmem:[%s1297 + $0x2] sm:$0xff]
        %v1395 = vld [vmem:[%s1297 + $0x12] sm:$0xff]
        %v1396 = vld [vmem:[%s1297 + $0x22] sm:$0xff]
        %v1397 = vld [vmem:[%s1297 + $0x32] sm:$0xff]
        %v1398 = vld [vmem:[%s1297 + $0x42] sm:$0xff]
        %v1399 = vld [vmem:[%s1297 + $0x52] sm:$0xff]
        %v1400 = vld [vmem:[%s1297 + $0x62] sm:$0xff]
        %v1401 = vld [vmem:[%s1297 + $0x72] sm:$0xff]
        %1402 = vst.msk [vmem:[#allocation4 + $0x10] sm:$0xff] %vm355, %v1394
        %1403 = vst.msk [vmem:[#allocation4 + $0x28] sm:$0xff] %vm355, %v1395
        %1404 = vst.msk [vmem:[#allocation4 + $0x40] sm:$0xff] %vm355, %v1396
        %1405 = vst.msk [vmem:[#allocation4 + $0x58] sm:$0xff] %vm355, %v1397
        %1406 = vst.msk [vmem:[#allocation4 + $0x70] sm:$0xff] %vm355, %v1398
        %1407 = vst.msk [vmem:[#allocation4 + $0x88] sm:$0xff] %vm355, %v1399
        %1408 = vst.msk [vmem:[#allocation4 + $0xa0] sm:$0xff] %vm355, %v1400
        %1409 = vst.msk [vmem:[#allocation4 + $0xb8] sm:$0xff] %vm355, %v1401
        %v1410 = vld [vmem:[#allocation4] sm:$0xff]
        %v1411 = vld [vmem:[#allocation4 + $0x8] sm:$0xff]
        %v1412 = vld [vmem:[#allocation4 + $0x10] sm:$0xff]
        %v1413 = vld [vmem:[#allocation4 + $0x18] sm:$0xff]
        %v1414 = vld [vmem:[#allocation4 + $0x20] sm:$0xff]
        %v1415 = vld [vmem:[#allocation4 + $0x28] sm:$0xff]
        %v1416 = vld [vmem:[#allocation4 + $0x30] sm:$0xff]
        %v1417 = vld [vmem:[#allocation4 + $0x38] sm:$0xff]
        %v1418 = vld [vmem:[#allocation4 + $0x40] sm:$0xff]
        %v1419 = vld [vmem:[#allocation4 + $0x48] sm:$0xff]
        %v1420 = vld [vmem:[#allocation4 + $0x50] sm:$0xff]
        %v1421 = vld [vmem:[#allocation4 + $0x58] sm:$0xff]
        %v1422 = vld [vmem:[#allocation4 + $0x60] sm:$0xff]
        %v1423 = vld [vmem:[#allocation4 + $0x68] sm:$0xff]
        %v1424 = vld [vmem:[#allocation4 + $0x70] sm:$0xff]
        %v1425 = vld [vmem:[#allocation4 + $0x78] sm:$0xff]
        %v1426 = vld [vmem:[#allocation4 + $0x80] sm:$0xff]
        %v1427 = vld [vmem:[#allocation4 + $0x88] sm:$0xff]
        %v1428 = vld [vmem:[#allocation4 + $0x90] sm:$0xff]
        %v1429 = vld [vmem:[#allocation4 + $0x98] sm:$0xff]
        %v1430 = vld [vmem:[#allocation4 + $0xa0] sm:$0xff]
        %v1431 = vld [vmem:[#allocation4 + $0xa8] sm:$0xff]
        %v1432 = vld [vmem:[#allocation4 + $0xb0] sm:$0xff]
        %v1433 = vld [vmem:[#allocation4 + $0xb8] sm:$0xff]
        %v1434 = vpack.c.bf16 %v1413, %v1410
        %v1435 = vpack.c.bf16 %v1414, %v1411
        %v1436 = vpack.c.bf16 %v1415, %v1412
        %v1437 = vpack.c.bf16 %v1419, %v1416
        %v1438 = vpack.c.bf16 %v1420, %v1417
        %v1439 = vpack.c.bf16 %v1421, %v1418
        %v1440 = vpack.c.bf16 %v1425, %v1422
        %v1441 = vpack.c.bf16 %v1426, %v1423
        %v1442 = vpack.c.bf16 %v1427, %v1424
        %v1443 = vpack.c.bf16 %v1431, %v1428
        %v1444 = vpack.c.bf16 %v1432, %v1429
        %v1445 = vpack.c.bf16 %v1433, %v1430
        %v1446 = vld [vmem:[%s4] sm:$0xf]
        %v1447 = vld [vmem:[%s4 + $0x4] sm:$0xf]
        %v1448 = vld [vmem:[%s4 + $0x8] sm:$0xf]
        %v1449 = vld [vmem:[%s4 + $0xc] sm:$0xf]
        %v1450 = vld [vmem:[%s4 + $0x10] sm:$0xf]
        %v1451 = vld [vmem:[%s4 + $0x14] sm:$0xf]
        %v1452 = vld [vmem:[%s4 + $0x18] sm:$0xf]
        %v1453 = vld [vmem:[%s4 + $0x1c] sm:$0xf]
        %v1454 = vld [vmem:[%s4 + $0x20] sm:$0xf]
        %v1455 = vld [vmem:[%s4 + $0x24] sm:$0xf]
        %v1456 = vld [vmem:[%s4 + $0x28] sm:$0xf]
        %v1457 = vld [vmem:[%s4 + $0x2c] sm:$0xf]
        %v1458 = vld [vmem:[%s4 + $0x30] sm:$0xf]
        %v1459 = vld [vmem:[%s4 + $0x34] sm:$0xf]
        %v1460 = vld [vmem:[%s4 + $0x38] sm:$0xf]
        %v1461 = vld [vmem:[%s4 + $0x3c] sm:$0xf]
        %v1462 = vld [vmem:[%s4 + $0x40] sm:$0xf]
        %v1463 = vld [vmem:[%s4 + $0x44] sm:$0xf]
        %v1464 = vld [vmem:[%s4 + $0x48] sm:$0xf]
        %v1465 = vld [vmem:[%s4 + $0x4c] sm:$0xf]
        %v1466 = vld [vmem:[%s4 + $0x50] sm:$0xf]
        %v1467 = vld [vmem:[%s4 + $0x54] sm:$0xf]
        %v1468 = vld [vmem:[%s4 + $0x58] sm:$0xf]
        %v1469 = vld [vmem:[%s4 + $0x5c] sm:$0xf]
        %v1470 = vld [vmem:[%s4 + $0x60] sm:$0xf]
        %v1471 = vld [vmem:[%s4 + $0x64] sm:$0xf]
        %v1472 = vld [vmem:[%s4 + $0x68] sm:$0xf]
        %v1473 = vld [vmem:[%s4 + $0x6c] sm:$0xf]
        %v1474 = vld [vmem:[%s4 + $0x70] sm:$0xf]
        %v1475 = vld [vmem:[%s4 + $0x74] sm:$0xf]
        %v1476 = vld [vmem:[%s4 + $0x78] sm:$0xf]
        %v1477 = vld [vmem:[%s4 + $0x7c] sm:$0xf]
        %v1478 = vld [vmem:[%s4 + $0x80] sm:$0xf]
        %v1479 = vld [vmem:[%s4 + $0x84] sm:$0xf]
        %v1480 = vld [vmem:[%s4 + $0x88] sm:$0xf]
        %v1481 = vld [vmem:[%s4 + $0x8c] sm:$0xf]
        %v1518 = vunpack.c.l.b16 %v1446
        %v1519 = vunpack.c.l.b16 %v1447
        %v1520 = vunpack.c.l.b16 %v1448
        %v1521 = vunpack.c.l.b16 %v1449
        %v1522 = vunpack.c.l.b16 %v1450
        %v1523 = vunpack.c.l.b16 %v1451
        %v1524 = vunpack.c.l.b16 %v1452
        %v1525 = vunpack.c.l.b16 %v1453
        %v1526 = vunpack.c.l.b16 %v1454
        %v1527 = vunpack.c.l.b16 %v1455
        %v1528 = vunpack.c.l.b16 %v1456
        %v1529 = vunpack.c.l.b16 %v1457
        %v1530 = vunpack.c.l.b16 %v1458
        %v1531 = vunpack.c.l.b16 %v1459
        %v1532 = vunpack.c.l.b16 %v1460
        %v1533 = vunpack.c.l.b16 %v1461
        %v1534 = vunpack.c.l.b16 %v1462
        %v1535 = vunpack.c.l.b16 %v1463
        %v1536 = vunpack.c.l.b16 %v1464
        %v1537 = vunpack.c.l.b16 %v1465
        %v1538 = vunpack.c.l.b16 %v1466
        %v1539 = vunpack.c.l.b16 %v1467
        %v1540 = vunpack.c.l.b16 %v1468
        %v1541 = vunpack.c.l.b16 %v1469
        %v1542 = vunpack.c.l.b16 %v1470
        %v1543 = vunpack.c.l.b16 %v1471
        %v1544 = vunpack.c.l.b16 %v1472
        %v1545 = vunpack.c.l.b16 %v1473
        %v1546 = vunpack.c.l.b16 %v1474
        %v1547 = vunpack.c.l.b16 %v1475
        %v1548 = vunpack.c.l.b16 %v1476
        %v1549 = vunpack.c.l.b16 %v1477
        %v1550 = vunpack.c.l.b16 %v1478
        %v1551 = vunpack.c.l.b16 %v1479
        %v1552 = vunpack.c.l.b16 %v1480
        %v1553 = vunpack.c.l.b16 %v1481
        %v1554 = vpack.c.b16 %v1519, %v1518
        %v1555 = vpack.c.b16 %v1521, %v1520
        %v1556 = vpack.c.b16 %v1523, %v1522
        %v1557 = vpack.c.b16 %v1525, %v1524
        %v1558 = vpack.c.b16 %v1527, %v1526
        %v1559 = vpack.c.b16 %v1529, %v1528
        %v1560 = vpack.c.b16 %v1531, %v1530
        %v1561 = vpack.c.b16 %v1533, %v1532
        %v1562 = vpack.c.b16 %v1535, %v1534
        %v1563 = vpack.c.b16 %v1537, %v1536
        %v1564 = vpack.c.b16 %v1539, %v1538
        %v1565 = vpack.c.b16 %v1541, %v1540
        %v1566 = vpack.c.b16 %v1543, %v1542
        %v1567 = vpack.c.b16 %v1545, %v1544
        %v1568 = vpack.c.b16 %v1547, %v1546
        %v1569 = vpack.c.b16 %v1549, %v1548
        %v1570 = vpack.c.b16 %v1551, %v1550
        %v1571 = vpack.c.b16 %v1553, %v1552
        %v1591 = vsel %vm355, %v1436, 0
        %v1594 = vsel %vm355, %v1439, 0
        %v1597 = vsel %vm355, %v1442, 0
        %v1600 = vsel %vm355, %v1445, 0
        %1602 = vmatprep.subr.bf16.mxu0 0
        %1603 = vmatpush1.bf16.msra.mxu0 %v1554
        %1604 = vmatprep.subr.bf16.mxu0 0
        %1605 = vmatpush1.bf16.msra.mxu0 %v1555
        %1606 = vmatprep.subr.bf16.mxu0 0
        %1607 = vmatpush1.bf16.msra.mxu0 %v1556
        %1608 = vmatprep.subr.bf16.mxu0 0
        %1609 = vmatpush1.bf16.msra.mxu0 %v1557
        %1610 = vmatprep.subr.bf16.mxu0 0
        %1611 = vmatpush1.bf16.msra.mxu0 %v1558
        %1612 = vmatprep.subr.bf16.mxu0 0
        %1613 = vmatpush1.bf16.msra.mxu0 %v1559
        %1614 = vmatprep.subr.bf16.mxu0 0
        %1615 = vmatpush1.bf16.msra.mxu0 %v1560
        %1616 = vmatprep.subr.bf16.mxu0 0
        %1617 = vmatpush1.bf16.msra.mxu0 %v1561
        %1618 = vmatprep.subr.bf16.mxu0 0
        %1619 = vmatpush1.bf16.msra.mxu0 %v1562
        %1620 = vmatprep.subr.bf16.mxu0 0
        %1621 = vmatpush1.bf16.msra.mxu0 %v1563
        %1622 = vmatprep.subr.bf16.mxu0 0
        %1623 = vmatpush1.bf16.msra.mxu0 %v1564
        %1624 = vmatprep.subr.bf16.mxu0 0
        %1625 = vmatpush1.bf16.msra.mxu0 %v1565
        %1626 = vmatprep.subr.bf16.mxu0 0
        %1627 = vmatpush1.bf16.msra.mxu0 %v1566
        %1628 = vmatprep.subr.bf16.mxu0 0
        %1629 = vmatpush1.bf16.msra.mxu0 %v1567
        %1630 = vmatprep.subr.bf16.mxu0 0
        %1631 = vmatpush1.bf16.msra.mxu0 %v1568
        %1632 = vmatprep.subr.bf16.mxu0 0
        %1633 = vmatpush1.bf16.msra.mxu0 %v1569
        %1634 = vmatprep.mubr.bf16.mxu0 %v1435
        %1635 = vmatmul.mubr.bf16.gmra.mrb[0].mxu0 %v1434
        %v1636 = vpop.f32.mrb[0].mxu0
        %v1637 = vadd.f32 0.0, %v1636
        %v1638 = vpop.f32.mrb[0].mxu0
        %v1639 = vpop.f32.mrb[0].mxu0
        %v1640 = vadd.f32 0.0, %v1639
        %v1641 = vpop.f32.mrb[0].mxu0
        %1642 = vmatprep.mubr.bf16.mxu0 %v1438
        %1643 = vmatmul.mubr.bf16.gmra.mrb[0].mxu0 %v1437
        %v1644 = vpop.f32.mrb[0].mxu0
        %v1645 = vadd.f32 0.0, %v1644
        %v1646 = vpop.f32.mrb[0].mxu0
        %v1647 = vpop.f32.mrb[0].mxu0
        %v1648 = vadd.f32 0.0, %v1647
        %v1649 = vpop.f32.mrb[0].mxu0
        %1650 = vmatprep.mubr.bf16.mxu0 %v1441
        %1651 = vmatmul.mubr.bf16.gmra.mrb[0].mxu0 %v1440
        %v1652 = vpop.f32.mrb[0].mxu0
        %v1653 = vadd.f32 0.0, %v1652
        %v1654 = vpop.f32.mrb[0].mxu0
        %v1655 = vpop.f32.mrb[0].mxu0
        %v1656 = vadd.f32 0.0, %v1655
        %v1657 = vpop.f32.mrb[0].mxu0
        %1658 = vmatprep.mubr.bf16.mxu0 %v1444
        %1659 = vmatmul.mubr.bf16.gmra.mrb[0].mxu0 %v1443
        %v1660 = vpop.f32.mrb[0].mxu0
        %v1661 = vadd.f32 0.0, %v1660
        %v1662 = vpop.f32.mrb[0].mxu0
        %v1663 = vpop.f32.mrb[0].mxu0
        %v1664 = vadd.f32 0.0, %v1663
        %v1665 = vpop.f32.mrb[0].mxu0
        %1666 = vdwg.mxu0
        %1667 = vmatprep.subr.bf16.mxu0 0
        %1668 = vmatpush1.bf16.msra.mxu0 %v1570
        %1669 = vmatprep.subr.bf16.mxu0 0
        %1670 = vmatpush1.bf16.msra.mxu0 %v1571
        %1671 = vmatprep.subr.bf16.mxu0 0
        %1672 = vmatpush1.bf16.msra.mxu0 0
        %1673 = vmatprep.subr.bf16.mxu0 0
        %1674 = vmatpush1.bf16.msra.mxu0 0
        %1675 = vmatprep.subr.bf16.mxu0 0
        %1676 = vmatpush1.bf16.msra.mxu0 0
        %1677 = vmatprep.subr.bf16.mxu0 0
        %1678 = vmatpush1.bf16.msra.mxu0 0
        %1679 = vmatprep.subr.bf16.mxu0 0
        %1680 = vmatpush1.bf16.msra.mxu0 0
        %1681 = vmatprep.subr.bf16.mxu0 0
        %1682 = vmatpush1.bf16.msra.mxu0 0
        %1683 = vmatprep.subr.bf16.mxu0 0
        %1684 = vmatpush1.bf16.msra.mxu0 0
        %1685 = vmatprep.subr.bf16.mxu0 0
        %1686 = vmatpush1.bf16.msra.mxu0 0
        %1687 = vmatprep.subr.bf16.mxu0 0
        %1688 = vmatpush1.bf16.msra.mxu0 0
        %1689 = vmatprep.subr.bf16.mxu0 0
        %1690 = vmatpush1.bf16.msra.mxu0 0
        %1691 = vmatprep.subr.bf16.mxu0 0
        %1692 = vmatpush1.bf16.msra.mxu0 0
        %1693 = vmatprep.subr.bf16.mxu0 0
        %1694 = vmatpush1.bf16.msra.mxu0 0
        %1695 = vmatprep.subr.bf16.mxu0 0
        %1696 = vmatpush1.bf16.msra.mxu0 0
        %1697 = vmatprep.subr.bf16.mxu0 0
        %1698 = vmatpush1.bf16.msra.mxu0 0
        %1699 = vmatprep.mubr.bf16.mxu0 0
        %1700 = vmatmul.mubr.bf16.gmra.mrb[0].mxu0 %v1591
        %v1701 = vpop.f32.mrb[0].mxu0
        %v1702 = vadd.f32 %v1637, %v1701
        %v1703 = vpop.f32.mrb[0].mxu0
        %v1704 = vpop.f32.mrb[0].mxu0
        %v1705 = vadd.f32 %v1640, %v1704
        %v1706 = vpop.f32.mrb[0].mxu0
        %1707 = vmatprep.mubr.bf16.mxu0 0
        %1708 = vmatmul.mubr.bf16.gmra.mrb[0].mxu0 %v1594
        %v1709 = vpop.f32.mrb[0].mxu0
        %v1710 = vadd.f32 %v1645, %v1709
        %v1711 = vpop.f32.mrb[0].mxu0
        %v1712 = vpop.f32.mrb[0].mxu0
        %v1713 = vadd.f32 %v1648, %v1712
        %v1714 = vpop.f32.mrb[0].mxu0
        %1715 = vmatprep.mubr.bf16.mxu0 0
        %1716 = vmatmul.mubr.bf16.gmra.mrb[0].mxu0 %v1597
        %v1717 = vpop.f32.mrb[0].mxu0
        %v1718 = vadd.f32 %v1653, %v1717
        %v1719 = vpop.f32.mrb[0].mxu0
        %v1720 = vpop.f32.mrb[0].mxu0
        %v1721 = vadd.f32 %v1656, %v1720
        %v1722 = vpop.f32.mrb[0].mxu0
        %1723 = vmatprep.mubr.bf16.mxu0 0
        %1724 = vmatmul.mubr.bf16.gmra.mrb[0].mxu0 %v1600
        %v1725 = vpop.f32.mrb[0].mxu0
        %v1726 = vadd.f32 %v1661, %v1725
        %v1727 = vpop.f32.mrb[0].mxu0
        %v1728 = vpop.f32.mrb[0].mxu0
        %v1729 = vadd.f32 %v1664, %v1728
        %v1730 = vpop.f32.mrb[0].mxu0
        %1731 = vdwg.mxu0
        %v1732 = vld [vmem:[%s5] sm:$0x1]
        %v1734 = vlaneseq
        %v1735 = vshrl.u32 %v1734, 7
        %v1736 = vsub.s32 0, %v1735
        %v1737 = vrot.slane %v1732, %v1736
        %v1739 = vmul.f32 %v1702, %v1737
        %v1740 = vmul.f32 %v1705, %v1737
        %v1741 = vmul.f32 %v1710, %v1737
        %v1742 = vmul.f32 %v1713, %v1737
        %v1743 = vmul.f32 %v1718, %v1737
        %v1744 = vmul.f32 %v1721, %v1737
        %v1745 = vmul.f32 %v1726, %v1737
        %v1746 = vmul.f32 %v1729, %v1737
        %v1747 = vld [vmem:[%s6] sm:$0x1]
        %v1749 = vlaneseq
        %v1750 = vshrl.u32 %v1749, 7
        %v1751 = vsub.s32 0, %v1750
        %v1752 = vrot.slane %v1747, %v1751
        %v1754 = vadd.f32 %v1739, %v1752
        %v1755 = vadd.f32 %v1740, %v1752
        %v1756 = vadd.f32 %v1741, %v1752
        %v1757 = vadd.f32 %v1742, %v1752
        %v1758 = vadd.f32 %v1743, %v1752
        %v1759 = vadd.f32 %v1744, %v1752
        %v1760 = vadd.f32 %v1745, %v1752
        %v1761 = vadd.f32 %v1746, %v1752
        %v1762 = vadd.f32 %v1754, %v346
        %v1763 = vadd.f32 %v1755, %v347
        %v1764 = vadd.f32 %v1756, %v348
        %v1765 = vadd.f32 %v1757, %v349
        %v1766 = vadd.f32 %v1758, %v350
        %v1767 = vadd.f32 %v1759, %v351
        %v1768 = vadd.f32 %v1760, %v352
        %v1769 = vadd.f32 %v1761, %v353
        %v1770 = vmax.f32 %v1762, 0.0
        %v1771 = vmax.f32 %v1763, 0.0
        %v1772 = vmax.f32 %v1764, 0.0
        %v1773 = vmax.f32 %v1765, 0.0
        %v1774 = vmax.f32 %v1766, 0.0
        %v1775 = vmax.f32 %v1767, 0.0
        %v1776 = vmax.f32 %v1768, 0.0
        %v1777 = vmax.f32 %v1769, 0.0
        %1778 = vst.msk [vmem:[%s290] sm:$0xff] %vm355, %v1770
        %1779 = vst.msk [vmem:[%s290 + $0x8] sm:$0xff] %vm355, %v1771
        %1780 = vst.msk [vmem:[%s290 + $0x10] sm:$0xff] %vm355, %v1772
        %1781 = vst.msk [vmem:[%s290 + $0x18] sm:$0xff] %vm355, %v1773
        %1782 = vst.msk [vmem:[%s290 + $0x20] sm:$0xff] %vm355, %v1774
        %1783 = vst.msk [vmem:[%s290 + $0x28] sm:$0xff] %vm355, %v1775
        %1784 = vst.msk [vmem:[%s290 + $0x30] sm:$0xff] %vm355, %v1776
        %1785 = vst.msk [vmem:[%s290 + $0x38] sm:$0xff] %vm355, %v1777
        %s1786 = sand.u32 %s197, 1
        %s1787 = scalar_lea.sflag [#allocation6], %s1786
        %s1788 = sand.u32 %s197, 1
        %s1789 = smul.addr %s1788, 64
        %s1790 = scalar_lea.vmem [#allocation5], %s1789
        // Predicated region
        $region53: #{tpu_custom_call.1} parent=47 // pred_check
          %p1791 = pneg %p207
        $region54: #{tpu_custom_call.1} parent=47 // pred_check_branch
          %1793 = sbr.rel (%p1791) target = $region56
        $region55: #{tpu_custom_call.1} parent=47 // pred_region
          %s1794 = sadd.s32 %s25, %s26
          %s1796 = ssub.s32 1024, 1024
          %1797 = vsyncadd %s1787, %s1796
          %s1798 = smul.addr %s1794, 8
          %s1799 = smul.addr %s1798, 128
          %s1800 = scalar_lea.hbm %s7, %s1799
          %s1801 = sshll.u32 %s1790, 4
          %s1802 = int_to_ptr.vmem [resolvable:$true] %s1801
          %1807 = dma.vmem_to_hbm [thread:$0]  %s1802, 1024, %s1800, %s1787, 128, 128, 8
        $region56: #{tpu_custom_call.1} parent=47 // pred_fallthru
          _
      $region48: #{tpu_custom_call.1} parent=5 // pred_fallthru
        _
      %p1808 = scmp.le.s32.totalorder 2, %s16
      // Predicated region
      $region57: #{tpu_custom_call.1} parent=5 // pred_check
        %p1809 = pneg %p1808
      $region58: #{tpu_custom_call.1} parent=5 // pred_check_branch
        %1811 = sbr.rel (%p1809) target = $region60
      $region59: #{tpu_custom_call.1} parent=5 // pred_region
        %s1812 = ssub.s32 %s16, 2
        // Predicated region
        $region61: #{tpu_custom_call.1} parent=59 // pred_check
          %p1813 = pneg %p213
        $region62: #{tpu_custom_call.1} parent=59 // pred_check_branch
          %1815 = sbr.rel (%p1813) target = $region64
        $region63: #{tpu_custom_call.1} parent=59 // pred_region
          %s1816 = sand.u32 %s198, 1
          %s1817 = scalar_lea.sflag [#allocation6], %s1816
          %s1818 = sand.u32 %s198, 1
          %s1819 = smul.addr %s1818, 64
          %s1820 = scalar_lea.vmem [#allocation5], %s1819
          %1821 = dma.done %s1817, 1024
        $region64: #{tpu_custom_call.1} parent=59 // pred_fallthru
          _
      $region60: #{tpu_custom_call.1} parent=5 // pred_fallthru
        _
    $region6: #{tpu_custom_call.1} parent=1 // loop_footer
      %s20 = sadd.s32 1, %s16
    $region7: #{tpu_custom_call.1} parent=1 // loop_footer_branch
      %15 = sbr.rel target = $region3
    $region8: #{tpu_custom_call.1} parent=1 // loop_exit
      _
    %1822 = vsyncpa [#allocation6], 1
    %s1823 = scalar_lea.sflag [#allocation6], 1
    %1824 = vsyncpa %s1823, 1

</llo_original>
